<compile_context>
chip_gen: v7x
topology: tpu7x:2x2x1
jax: 0.10.0
libtpu: 0.0.40
codegen_flags: <defaults>
</compile_context>

<pallas_src>
import functools

import jax
import jax.numpy as jnp
from jax.experimental import pallas as pl
from jax.experimental.pallas import tpu as pltpu

_SQRT_HALF = 0.7071067811865476


def _gelu_erf(y):
    # exact GELU, mirrors the module's v-sequence: (0.5*y) * (erf(y*0.70710678) + 1)
    return (y * 0.5) * (jax.lax.erf(y * _SQRT_HALF) + 1.0)


def _fused_kernel(p0_ref, p1_ref, w0_ref, b0_ref, w1_ref, b1_ref,
                  w2_ref, b2_ref, o18_ref, o12_ref, p2_ref, *, h_mid, w_mid):
    """One batch image per grid step; all tensors channel-major (C, H*W)."""
    c_mid = w0_ref.shape[0]            # conv0 output channels (8)
    m0 = h_mid * w_mid                 # conv0/conv2 spatial size (256)

    # ---- conv0 + GELU: one MXU GEMM, channel-major result (8, 256) ----
    y0 = jnp.dot(w0_ref[...], p0_ref[...], preferred_element_type=jnp.float32)
    a0 = _gelu_erf(y0 + b0_ref[...])                       # (8, 256) -> 2 vregs

    # ---- conv1 + GELU: 1x1 conv, K=3 -> three VPU FMAs, channel-major ----
    y1 = b1_ref[...]                                       # (12, 1)
    for c in range(p1_ref.shape[0]):
        y1 = y1 + w1_ref[:, c:c + 1] * p1_ref[c:c + 1, :]
    o12_ref[...] = _gelu_erf(y1)                           # (12, 1089), NCHW-flat

    # ---- conv2 im2col in registers: 9 lane-rolled, boundary-masked copies of
    #      a0, stored at sublane-aligned offsets into the (72, 256) scratch ----
    m_idx = jax.lax.broadcasted_iota(jnp.int32, (c_mid, m0), 1)
    if (w_mid & (w_mid - 1)) == 0:                         # column index within a row
        ww = m_idx & (w_mid - 1)
    else:
        ww = m_idx % w_mid
    for kh in range(3):
        for kw in range(3):
            delta = (kh - 1) * w_mid + (kw - 1)            # flat source offset
            piece = a0 if delta == 0 else pltpu.roll(a0, shift=(-delta) % m0, axis=1)
            conds = []
            if kh == 0:
                conds.append(m_idx >= w_mid)               # needs source row h-1
            elif kh == 2:
                conds.append(m_idx < (h_mid - 1) * w_mid)  # needs source row h+1
            if kw == 0:
                conds.append(ww >= 1)                      # needs source col w-1
            elif kw == 2:
                conds.append(ww <= w_mid - 2)              # needs source col w+1
            if conds:
                cond = conds[0]
                for extra in conds[1:]:
                    cond = jnp.logical_and(cond, extra)
                piece = jnp.where(cond, piece, 0.0)
            tap = kh * 3 + kw
            p2_ref[tap * c_mid:(tap + 1) * c_mid, :] = piece

    # ---- conv2 + GELU: single (85, 72) x (72, 256) MXU GEMM ----
    y2 = jnp.dot(w2_ref[...], p2_ref[...], preferred_element_type=jnp.float32)
    o18_ref[...] = _gelu_erf(y2 + b2_ref[...])             # (85, 256), NCHW-flat


def _patches_cmajor(x_nchw, kh, kw, stride, padding):
    """One-XLA-op im2col: (N,C,H,W) -> (N, C*kh*kw, Ho*Wo).

    Feature order is (c, kh, kw) (c slowest), matching weight.reshape(Cout, -1)."""
    p = jax.lax.conv_general_dilated_patches(
        x_nchw, (kh, kw), (stride, stride),
        [(padding, padding), (padding, padding)],
        dimension_numbers=("NCHW", "OIHW", "NCHW"))
    n, f, ho, wo = p.shape
    return p.reshape(n, f, ho * wo), (ho, wo)


def fused_forward(params, x_nchw):
    w0, b0 = params["conv0"]
    w1, b1 = params["conv1"]
    w2, b2 = params["conv2"]

    n, cin = x_nchw.shape[0], x_nchw.shape[1]
    c0, c1, c2 = w0.shape[0], w1.shape[0], w2.shape[0]
    assert w2.shape[1:] == (c0, 3, 3)

    # Host glue: one patch-extraction op per conv that reads x (channel-major).
    p0, (h0, w0sp) = _patches_cmajor(x_nchw, w0.shape[2], w0.shape[3], 4, 1)  # (n, 75, 256)
    p1, (h1, w1sp) = _patches_cmajor(x_nchw, 1, 1, 2, 1)                       # (n, 3, 1089)
    k0 = cin * w0.shape[2] * w0.shape[3]
    m0, m1 = h0 * w0sp, h1 * w1sp

    # GEMM-shaped weights/biases.  No channel padding, no output transposes.
    w0m = w0.reshape(c0, k0).astype(jnp.float32)
    b0m = b0.reshape(c0, 1).astype(jnp.float32)
    w1m = w1.reshape(c1, cin).astype(jnp.float32)
    b1m = b1.reshape(c1, 1).astype(jnp.float32)
    w2m = w2.transpose(0, 2, 3, 1).reshape(c2, 9 * c0).astype(jnp.float32)  # cols = (kh, kw, c)
    b2m = b2.reshape(c2, 1).astype(jnp.float32)

    kernel = functools.partial(_fused_kernel, h_mid=h0, w_mid=w0sp)
    o18, o12 = pl.pallas_call(
        kernel,
        out_shape=(
            jax.ShapeDtypeStruct((n, c2, m0), jnp.float32),   # v18, NCHW-flat
            jax.ShapeDtypeStruct((n, c1, m1), jnp.float32),   # v12, NCHW-flat
        ),
        grid_spec=pltpu.PrefetchScalarGridSpec(
            num_scalar_prefetch=0,
            grid=(n,),                                        # one image per step
            in_specs=[
                pl.BlockSpec((None, k0, m0), lambda b: (b, 0, 0)),     # p0 patches
                pl.BlockSpec((None, cin, m1), lambda b: (b, 0, 0)),    # p1 patches
                pl.BlockSpec((c0, k0), lambda b: (0, 0)),              # w0
                pl.BlockSpec((c0, 1), lambda b: (0, 0)),               # b0
                pl.BlockSpec((c1, cin), lambda b: (0, 0)),             # w1
                pl.BlockSpec((c1, 1), lambda b: (0, 0)),               # b1
                pl.BlockSpec((c2, 9 * c0), lambda b: (0, 0)),          # w2
                pl.BlockSpec((c2, 1), lambda b: (0, 0)),               # b2
            ],
            out_specs=[
                pl.BlockSpec((None, c2, m0), lambda b: (b, 0, 0)),
                pl.BlockSpec((None, c1, m1), lambda b: (b, 0, 0)),
            ],
            scratch_shapes=[pltpu.VMEM((9 * c0, m0), jnp.float32)],    # conv2 im2col
        ),
        compiler_params=pltpu.CompilerParams(
            dimension_semantics=("parallel",)),
    )(p0, p1, w0m, b0m, w1m, b1m, w2m, b2m)

    v18 = o18.reshape(n, c2, h0, w0sp)     # already NCHW, pure reshape
    v12 = o12.reshape(n, c1, h1, w1sp)     # already NCHW, pure reshape
    return v18, v12


forward = jax.jit(fused_forward)


def init_params(key):
    def conv_init(k, cout, cin, kh, kw):
        k1, k2 = jax.random.split(k)
        fan_in = cin * kh * kw
        bound = 1.0 / float(fan_in) ** 0.5
        w = jax.random.uniform(k1, (cout, cin, kh, kw), jnp.float32, -bound, bound)
        b = jax.random.uniform(k2, (cout,), jnp.float32, -bound, bound)
        return w, b

    k0, k1, k2 = jax.random.split(key, 3)
    return {
        "conv0": conv_init(k0, 8, 3, 5, 5),      # Conv2d(3, 8, 5, stride=4, pad=1)
        "conv1": conv_init(k1, 12, 3, 1, 1),     # Conv2d(3, int(85/7)=12, 1, stride=2, pad=1)
        # TODO(synk): the original module declares conv2 with in_channels=12 but feeds it
        # conv0's 8-channel output (the PyTorch forward raises at runtime); use 8 so the
        # composed pipeline is well-defined.
        "conv2": conv_init(k2, 85, 8, 3, 3),     # Conv2d(8, 85, 3, stride=1, pad=1)
    }


def _ref_conv_gelu(x, w, b, stride, padding):
    y = jax.lax.conv_general_dilated(
        x, w, (stride, stride), [(padding, padding), (padding, padding)],
        dimension_numbers=("NCHW", "OIHW", "NCHW"))
    y = y + b[None, :, None, None]
    return 0.5 * y * (jax.lax.erf(y * _SQRT_HALF) + 1.0)


if __name__ == "__main__":
    key = jax.random.PRNGKey(0)
    kp, kx = jax.random.split(key)
    params = init_params(kp)
    x = jax.random.normal(kx, (2, 3, 64, 64), jnp.float32)   # batch=2 exercises the parallel grid

    v18, v12 = forward(params, x)
    jax.block_until_ready((v18, v12))

    # correctness check against a plain-JAX reference
    w0, b0 = params["conv0"]
    w1, b1 = params["conv1"]
    w2, b2 = params["conv2"]
    ref18 = _ref_conv_gelu(_ref_conv_gelu(x, w0, b0, 4, 1), w2, b2, 1, 1)
    ref12 = _ref_conv_gelu(x, w1, b1, 2, 1)
    assert v18.shape == (2, 85, 16, 16), v18.shape
    assert v12.shape == (2, 12, 33, 33), v12.shape
    assert jnp.allclose(v18, ref18, atol=2e-3, rtol=2e-3), float(jnp.max(jnp.abs(v18 - ref18)))
    assert jnp.allclose(v12, ref12, atol=2e-3, rtol=2e-3), float(jnp.max(jnp.abs(v12 - ref12)))

    print("KERNEL_OK")
</pallas_src>

<mosaic_0001>
module attributes {stable_mosaic.version = 11 : i64} {
  func.func @_fused_kernel(%arg0: i32, %arg1: memref<1x75x256xf32, #tpu.memory_space<vmem>>, %arg2: memref<1x3x1089xf32, #tpu.memory_space<vmem>>, %arg3: memref<8x75xf32, #tpu.memory_space<vmem>>, %arg4: memref<8x1xf32, #tpu.memory_space<vmem>>, %arg5: memref<12x3xf32, #tpu.memory_space<vmem>>, %arg6: memref<12x1xf32, #tpu.memory_space<vmem>>, %arg7: memref<85x72xf32, #tpu.memory_space<vmem>>, %arg8: memref<85x1xf32, #tpu.memory_space<vmem>>, %arg9: memref<1x85x256xf32, #tpu.memory_space<vmem>>, %arg10: memref<1x12x1089xf32, #tpu.memory_space<vmem>>, %arg11: memref<72x256xf32, #tpu.memory_space<vmem>>) attributes {dimension_semantics = [#tpu.dimension_semantics<parallel>], iteration_bounds = array<i64: 2>, scalar_prefetch = 0 : i64, scratch_operands = 1 : i64, tpu.core_type = #tpu.core_type<tc>, window_params = [{transform_indices = @transform_0, window_bounds = array<i64: 1, 75, 256>}, {transform_indices = @transform_1, window_bounds = array<i64: 1, 3, 1089>}, {pipeline_mode = #tpu.pipeline_mode<synchronous>, transform_indices = @transform_2, window_bounds = array<i64: 8, 75>}, {pipeline_mode = #tpu.pipeline_mode<synchronous>, transform_indices = @transform_3, window_bounds = array<i64: 8, 1>}, {pipeline_mode = #tpu.pipeline_mode<synchronous>, transform_indices = @transform_4, window_bounds = array<i64: 12, 3>}, {pipeline_mode = #tpu.pipeline_mode<synchronous>, transform_indices = @transform_5, window_bounds = array<i64: 12, 1>}, {pipeline_mode = #tpu.pipeline_mode<synchronous>, transform_indices = @transform_6, window_bounds = array<i64: 85, 72>}, {pipeline_mode = #tpu.pipeline_mode<synchronous>, transform_indices = @transform_7, window_bounds = array<i64: 85, 1>}, {transform_indices = @transform_8, window_bounds = array<i64: 1, 85, 256>}, {transform_indices = @transform_9, window_bounds = array<i64: 1, 12, 1089>}]} {
    %c0 = arith.constant 0 : index
    %c0_0 = arith.constant 0 : index
    %0 = vector.load %arg3[%c0, %c0_0] : memref<8x75xf32, #tpu.memory_space<vmem>>, vector<8x75xf32>
    %c0_1 = arith.constant 0 : index
    %c0_2 = arith.constant 0 : index
    %c0_3 = arith.constant 0 : index
    %1 = vector.load %arg1[%c0_1, %c0_2, %c0_3] : memref<1x75x256xf32, #tpu.memory_space<vmem>>, vector<1x75x256xf32>
    %2 = vector.shape_cast %1 : vector<1x75x256xf32> to vector<75x256xf32>
    %cst = arith.constant dense<0.000000e+00> : vector<8x256xf32>
    %3 = tpu.matmul %0, %2, %cst {dimension_numbers = #tpu.dot_dimension_numbers<[1], [0], [0], [1], [0, 0, 1, 1], [], []>} : vector<8x75xf32>, vector<75x256xf32>, vector<8x256xf32> -> vector<8x256xf32>
    %c0_4 = arith.constant 0 : index
    %c0_5 = arith.constant 0 : index
    %4 = vector.load %arg4[%c0_4, %c0_5] : memref<8x1xf32, #tpu.memory_space<vmem>>, vector<8x1xf32>
    %5 = vector.broadcast %4 : vector<8x1xf32> to vector<8x256xf32>
    %6 = arith.addf %3, %5 : vector<8x256xf32>
    %cst_6 = arith.constant 5.000000e-01 : f32
    %7 = vector.broadcast %cst_6 : f32 to vector<8x256xf32>
    %8 = arith.mulf %6, %7 : vector<8x256xf32>
    %cst_7 = arith.constant 0.707106769 : f32
    %9 = vector.broadcast %cst_7 : f32 to vector<8x256xf32>
    %10 = arith.mulf %6, %9 : vector<8x256xf32>
    %11 = math.erf %10 : vector<8x256xf32>
    %cst_8 = arith.constant 1.000000e+00 : f32
    %12 = vector.broadcast %cst_8 : f32 to vector<8x256xf32>
    %13 = arith.addf %11, %12 : vector<8x256xf32>
    %14 = arith.mulf %8, %13 : vector<8x256xf32>
    %c0_9 = arith.constant 0 : index
    %c0_10 = arith.constant 0 : index
    %15 = vector.load %arg6[%c0_9, %c0_10] : memref<12x1xf32, #tpu.memory_space<vmem>>, vector<12x1xf32>
    %c0_11 = arith.constant 0 : index
    %c0_12 = arith.constant 0 : index
    %16 = vector.load %arg5[%c0_11, %c0_12] : memref<12x3xf32, #tpu.memory_space<vmem>>, vector<12x1xf32>
    %c0_13 = arith.constant 0 : index
    %c0_14 = arith.constant 0 : index
    %c0_15 = arith.constant 0 : index
    %17 = vector.load %arg2[%c0_13, %c0_14, %c0_15] : memref<1x3x1089xf32, #tpu.memory_space<vmem>>, vector<1x1x1089xf32>
    %18 = vector.shape_cast %17 : vector<1x1x1089xf32> to vector<1x1089xf32>
    %19 = vector.broadcast %16 : vector<12x1xf32> to vector<12x1089xf32>
    %20 = vector.broadcast %18 : vector<1x1089xf32> to vector<12x1089xf32>
    %21 = arith.mulf %19, %20 : vector<12x1089xf32>
    %22 = vector.broadcast %15 : vector<12x1xf32> to vector<12x1089xf32>
    %23 = arith.addf %22, %21 : vector<12x1089xf32>
    %c0_16 = arith.constant 0 : index
    %c1 = arith.constant 1 : index
    %24 = vector.load %arg5[%c0_16, %c1] : memref<12x3xf32, #tpu.memory_space<vmem>>, vector<12x1xf32>
    %c0_17 = arith.constant 0 : index
    %c1_18 = arith.constant 1 : index
    %c0_19 = arith.constant 0 : index
    %25 = vector.load %arg2[%c0_17, %c1_18, %c0_19] : memref<1x3x1089xf32, #tpu.memory_space<vmem>>, vector<1x1x1089xf32>
    %26 = vector.shape_cast %25 : vector<1x1x1089xf32> to vector<1x1089xf32>
    %27 = vector.broadcast %24 : vector<12x1xf32> to vector<12x1089xf32>
    %28 = vector.broadcast %26 : vector<1x1089xf32> to vector<12x1089xf32>
    %29 = arith.mulf %27, %28 : vector<12x1089xf32>
    %30 = arith.addf %23, %29 : vector<12x1089xf32>
    %c0_20 = arith.constant 0 : index
    %c2 = arith.constant 2 : index
    %31 = vector.load %arg5[%c0_20, %c2] : memref<12x3xf32, #tpu.memory_space<vmem>>, vector<12x1xf32>
    %c0_21 = arith.constant 0 : index
    %c2_22 = arith.constant 2 : index
    %c0_23 = arith.constant 0 : index
    %32 = vector.load %arg2[%c0_21, %c2_22, %c0_23] : memref<1x3x1089xf32, #tpu.memory_space<vmem>>, vector<1x1x1089xf32>
    %33 = vector.shape_cast %32 : vector<1x1x1089xf32> to vector<1x1089xf32>
    %34 = vector.broadcast %31 : vector<12x1xf32> to vector<12x1089xf32>
    %35 = vector.broadcast %33 : vector<1x1089xf32> to vector<12x1089xf32>
    %36 = arith.mulf %34, %35 : vector<12x1089xf32>
    %37 = arith.addf %30, %36 : vector<12x1089xf32>
    %cst_24 = arith.constant 5.000000e-01 : f32
    %38 = vector.broadcast %cst_24 : f32 to vector<12x1089xf32>
    %39 = arith.mulf %37, %38 : vector<12x1089xf32>
    %cst_25 = arith.constant 0.707106769 : f32
    %40 = vector.broadcast %cst_25 : f32 to vector<12x1089xf32>
    %41 = arith.mulf %37, %40 : vector<12x1089xf32>
    %42 = math.erf %41 : vector<12x1089xf32>
    %cst_26 = arith.constant 1.000000e+00 : f32
    %43 = vector.broadcast %cst_26 : f32 to vector<12x1089xf32>
    %44 = arith.addf %42, %43 : vector<12x1089xf32>
    %45 = arith.mulf %39, %44 : vector<12x1089xf32>
    %c0_27 = arith.constant 0 : index
    %c0_28 = arith.constant 0 : index
    %c0_29 = arith.constant 0 : index
    %46 = vector.load %arg10[%c0_27, %c0_28, %c0_29] : memref<1x12x1089xf32, #tpu.memory_space<vmem>>, vector<1x12x1089xf32>
    %47 = vector.shape_cast %46 : vector<1x12x1089xf32> to vector<12x1089xf32>
    %48 = vector.shape_cast %45 : vector<12x1089xf32> to vector<1x12x1089xf32>
    tpu.vector_store %arg10[%c0_27, %c0_28, %c0_29], %48 {strides = array<i32>} : memref<1x12x1089xf32, #tpu.memory_space<vmem>>, vector<1x12x1089xf32>,
    %49 = tpu.iota {dimensions = array<i32: 1>} : vector<8x256xi32>
    %c15_i32 = arith.constant 15 : i32
    %50 = vector.broadcast %c15_i32 : i32 to vector<8x256xi32>
    %51 = arith.andi %49, %50 : vector<8x256xi32>
    %c17_i32 = arith.constant 17 : i32
    %52 = tpu.dynamic_rotate %14 by %c17_i32 dim 1 : vector<8x256xf32>, i32 -> vector<8x256xf32>
    %c16_i32 = arith.constant 16 : i32
    %53 = vector.broadcast %c16_i32 : i32 to vector<8x256xi32>
    %54 = arith.cmpi sge, %49, %53 : vector<8x256xi32>
    %c1_i32 = arith.constant 1 : i32
    %55 = vector.broadcast %c1_i32 : i32 to vector<8x256xi32>
    %56 = arith.cmpi sge, %51, %55 : vector<8x256xi32>
    %57 = arith.andi %54, %56 : vector<8x256xi1>
    %cst_30 = arith.constant 0.000000e+00 : f32
    %58 = vector.broadcast %cst_30 : f32 to vector<8x256xf32>
    %59 = arith.select %57, %52, %58 : vector<8x256xi1>, vector<8x256xf32>
    %c0_31 = arith.constant 0 : index
    %c0_32 = arith.constant 0 : index
    %60 = vector.load %arg11[%c0_31, %c0_32] : memref<72x256xf32, #tpu.memory_space<vmem>>, vector<8x256xf32>
    tpu.vector_store %arg11[%c0_31, %c0_32], %59 {strides = array<i32>} : memref<72x256xf32, #tpu.memory_space<vmem>>, vector<8x256xf32>,
    %c16_i32_33 = arith.constant 16 : i32
    %61 = tpu.dynamic_rotate %14 by %c16_i32_33 dim 1 : vector<8x256xf32>, i32 -> vector<8x256xf32>
    %c16_i32_34 = arith.constant 16 : i32
    %62 = vector.broadcast %c16_i32_34 : i32 to vector<8x256xi32>
    %63 = arith.cmpi sge, %49, %62 : vector<8x256xi32>
    %cst_35 = arith.constant 0.000000e+00 : f32
    %64 = vector.broadcast %cst_35 : f32 to vector<8x256xf32>
    %65 = arith.select %63, %61, %64 : vector<8x256xi1>, vector<8x256xf32>
    %c8 = arith.constant 8 : index
    %c0_36 = arith.constant 0 : index
    %66 = vector.load %arg11[%c8, %c0_36] : memref<72x256xf32, #tpu.memory_space<vmem>>, vector<8x256xf32>
    tpu.vector_store %arg11[%c8, %c0_36], %65 {strides = array<i32>} : memref<72x256xf32, #tpu.memory_space<vmem>>, vector<8x256xf32>,
    %c15_i32_37 = arith.constant 15 : i32
    %67 = tpu.dynamic_rotate %14 by %c15_i32_37 dim 1 : vector<8x256xf32>, i32 -> vector<8x256xf32>
    %c16_i32_38 = arith.constant 16 : i32
    %68 = vector.broadcast %c16_i32_38 : i32 to vector<8x256xi32>
    %69 = arith.cmpi sge, %49, %68 : vector<8x256xi32>
    %c14_i32 = arith.constant 14 : i32
    %70 = vector.broadcast %c14_i32 : i32 to vector<8x256xi32>
    %71 = arith.cmpi sle, %51, %70 : vector<8x256xi32>
    %72 = arith.andi %69, %71 : vector<8x256xi1>
    %cst_39 = arith.constant 0.000000e+00 : f32
    %73 = vector.broadcast %cst_39 : f32 to vector<8x256xf32>
    %74 = arith.select %72, %67, %73 : vector<8x256xi1>, vector<8x256xf32>
    %c16 = arith.constant 16 : index
    %c0_40 = arith.constant 0 : index
    %75 = vector.load %arg11[%c16, %c0_40] : memref<72x256xf32, #tpu.memory_space<vmem>>, vector<8x256xf32>
    tpu.vector_store %arg11[%c16, %c0_40], %74 {strides = array<i32>} : memref<72x256xf32, #tpu.memory_space<vmem>>, vector<8x256xf32>,
    %c1_i32_41 = arith.constant 1 : i32
    %76 = tpu.dynamic_rotate %14 by %c1_i32_41 dim 1 : vector<8x256xf32>, i32 -> vector<8x256xf32>
    %c1_i32_42 = arith.constant 1 : i32
    %77 = vector.broadcast %c1_i32_42 : i32 to vector<8x256xi32>
    %78 = arith.cmpi sge, %51, %77 : vector<8x256xi32>
    %cst_43 = arith.constant 0.000000e+00 : f32
    %79 = vector.broadcast %cst_43 : f32 to vector<8x256xf32>
    %80 = arith.select %78, %76, %79 : vector<8x256xi1>, vector<8x256xf32>
    %c24 = arith.constant 24 : index
    %c0_44 = arith.constant 0 : index
    %81 = vector.load %arg11[%c24, %c0_44] : memref<72x256xf32, #tpu.memory_space<vmem>>, vector<8x256xf32>
    tpu.vector_store %arg11[%c24, %c0_44], %80 {strides = array<i32>} : memref<72x256xf32, #tpu.memory_space<vmem>>, vector<8x256xf32>,
    %c32 = arith.constant 32 : index
    %c0_45 = arith.constant 0 : index
    %82 = vector.load %arg11[%c32, %c0_45] : memref<72x256xf32, #tpu.memory_space<vmem>>, vector<8x256xf32>
    tpu.vector_store %arg11[%c32, %c0_45], %14 {strides = array<i32>} : memref<72x256xf32, #tpu.memory_space<vmem>>, vector<8x256xf32>,
    %c255_i32 = arith.constant 255 : i32
    %83 = tpu.dynamic_rotate %14 by %c255_i32 dim 1 : vector<8x256xf32>, i32 -> vector<8x256xf32>
    %c14_i32_46 = arith.constant 14 : i32
    %84 = vector.broadcast %c14_i32_46 : i32 to vector<8x256xi32>
    %85 = arith.cmpi sle, %51, %84 : vector<8x256xi32>
    %cst_47 = arith.constant 0.000000e+00 : f32
    %86 = vector.broadcast %cst_47 : f32 to vector<8x256xf32>
    %87 = arith.select %85, %83, %86 : vector<8x256xi1>, vector<8x256xf32>
    %c40 = arith.constant 40 : index
    %c0_48 = arith.constant 0 : index
    %88 = vector.load %arg11[%c40, %c0_48] : memref<72x256xf32, #tpu.memory_space<vmem>>, vector<8x256xf32>
    tpu.vector_store %arg11[%c40, %c0_48], %87 {strides = array<i32>} : memref<72x256xf32, #tpu.memory_space<vmem>>, vector<8x256xf32>,
    %c241_i32 = arith.constant 241 : i32
    %89 = tpu.dynamic_rotate %14 by %c241_i32 dim 1 : vector<8x256xf32>, i32 -> vector<8x256xf32>
    %c240_i32 = arith.constant 240 : i32
    %90 = vector.broadcast %c240_i32 : i32 to vector<8x256xi32>
    %91 = arith.cmpi slt, %49, %90 : vector<8x256xi32>
    %c1_i32_49 = arith.constant 1 : i32
    %92 = vector.broadcast %c1_i32_49 : i32 to vector<8x256xi32>
    %93 = arith.cmpi sge, %51, %92 : vector<8x256xi32>
    %94 = arith.andi %91, %93 : vector<8x256xi1>
    %cst_50 = arith.constant 0.000000e+00 : f32
    %95 = vector.broadcast %cst_50 : f32 to vector<8x256xf32>
    %96 = arith.select %94, %89, %95 : vector<8x256xi1>, vector<8x256xf32>
    %c48 = arith.constant 48 : index
    %c0_51 = arith.constant 0 : index
    %97 = vector.load %arg11[%c48, %c0_51] : memref<72x256xf32, #tpu.memory_space<vmem>>, vector<8x256xf32>
    tpu.vector_store %arg11[%c48, %c0_51], %96 {strides = array<i32>} : memref<72x256xf32, #tpu.memory_space<vmem>>, vector<8x256xf32>,
    %c240_i32_52 = arith.constant 240 : i32
    %98 = tpu.dynamic_rotate %14 by %c240_i32_52 dim 1 : vector<8x256xf32>, i32 -> vector<8x256xf32>
    %c240_i32_53 = arith.constant 240 : i32
    %99 = vector.broadcast %c240_i32_53 : i32 to vector<8x256xi32>
    %100 = arith.cmpi slt, %49, %99 : vector<8x256xi32>
    %cst_54 = arith.constant 0.000000e+00 : f32
    %101 = vector.broadcast %cst_54 : f32 to vector<8x256xf32>
    %102 = arith.select %100, %98, %101 : vector<8x256xi1>, vector<8x256xf32>
    %c56 = arith.constant 56 : index
    %c0_55 = arith.constant 0 : index
    %103 = vector.load %arg11[%c56, %c0_55] : memref<72x256xf32, #tpu.memory_space<vmem>>, vector<8x256xf32>
    tpu.vector_store %arg11[%c56, %c0_55], %102 {strides = array<i32>} : memref<72x256xf32, #tpu.memory_space<vmem>>, vector<8x256xf32>,
    %c239_i32 = arith.constant 239 : i32
    %104 = tpu.dynamic_rotate %14 by %c239_i32 dim 1 : vector<8x256xf32>, i32 -> vector<8x256xf32>
    %c240_i32_56 = arith.constant 240 : i32
    %105 = vector.broadcast %c240_i32_56 : i32 to vector<8x256xi32>
    %106 = arith.cmpi slt, %49, %105 : vector<8x256xi32>
    %c14_i32_57 = arith.constant 14 : i32
    %107 = vector.broadcast %c14_i32_57 : i32 to vector<8x256xi32>
    %108 = arith.cmpi sle, %51, %107 : vector<8x256xi32>
    %109 = arith.andi %106, %108 : vector<8x256xi1>
    %cst_58 = arith.constant 0.000000e+00 : f32
    %110 = vector.broadcast %cst_58 : f32 to vector<8x256xf32>
    %111 = arith.select %109, %104, %110 : vector<8x256xi1>, vector<8x256xf32>
    %c64 = arith.constant 64 : index
    %c0_59 = arith.constant 0 : index
    %112 = vector.load %arg11[%c64, %c0_59] : memref<72x256xf32, #tpu.memory_space<vmem>>, vector<8x256xf32>
    tpu.vector_store %arg11[%c64, %c0_59], %111 {strides = array<i32>} : memref<72x256xf32, #tpu.memory_space<vmem>>, vector<8x256xf32>,
    %c0_60 = arith.constant 0 : index
    %c0_61 = arith.constant 0 : index
    %113 = vector.load %arg7[%c0_60, %c0_61] : memref<85x72xf32, #tpu.memory_space<vmem>>, vector<85x72xf32>
    %c0_62 = arith.constant 0 : index
    %c0_63 = arith.constant 0 : index
    %114 = vector.load %arg11[%c0_62, %c0_63] : memref<72x256xf32, #tpu.memory_space<vmem>>, vector<72x256xf32>
    %cst_64 = arith.constant dense<0.000000e+00> : vector<85x256xf32>
    %115 = tpu.matmul %113, %114, %cst_64 {dimension_numbers = #tpu.dot_dimension_numbers<[1], [0], [0], [1], [0, 0, 1, 1], [], []>} : vector<85x72xf32>, vector<72x256xf32>, vector<85x256xf32> -> vector<85x256xf32>
    %c0_65 = arith.constant 0 : index
    %c0_66 = arith.constant 0 : index
    %116 = vector.load %arg8[%c0_65, %c0_66] : memref<85x1xf32, #tpu.memory_space<vmem>>, vector<85x1xf32>
    %117 = vector.broadcast %116 : vector<85x1xf32> to vector<85x256xf32>
    %118 = arith.addf %115, %117 : vector<85x256xf32>
    %cst_67 = arith.constant 5.000000e-01 : f32
    %119 = vector.broadcast %cst_67 : f32 to vector<85x256xf32>
    %120 = arith.mulf %118, %119 : vector<85x256xf32>
    %cst_68 = arith.constant 0.707106769 : f32
    %121 = vector.broadcast %cst_68 : f32 to vector<85x256xf32>
    %122 = arith.mulf %118, %121 : vector<85x256xf32>
    %123 = math.erf %122 : vector<85x256xf32>
    %cst_69 = arith.constant 1.000000e+00 : f32
    %124 = vector.broadcast %cst_69 : f32 to vector<85x256xf32>
    %125 = arith.addf %123, %124 : vector<85x256xf32>
    %126 = arith.mulf %120, %125 : vector<85x256xf32>
    %c0_70 = arith.constant 0 : index
    %c0_71 = arith.constant 0 : index
    %c0_72 = arith.constant 0 : index
    %127 = vector.load %arg9[%c0_70, %c0_71, %c0_72] : memref<1x85x256xf32, #tpu.memory_space<vmem>>, vector<1x85x256xf32>
    %128 = vector.shape_cast %127 : vector<1x85x256xf32> to vector<85x256xf32>
    %129 = vector.shape_cast %126 : vector<85x256xf32> to vector<1x85x256xf32>
    tpu.vector_store %arg9[%c0_70, %c0_71, %c0_72], %129 {strides = array<i32>} : memref<1x85x256xf32, #tpu.memory_space<vmem>>, vector<1x85x256xf32>,
    return
  }
  func.func @transform_0(%arg0: i32) -> (i32, i32, i32) {
    %c0_i32 = arith.constant 0 : i32
    %c0_i32_0 = arith.constant 0 : i32
    %c0_i32_1 = arith.constant 0 : i32
    return %arg0, %c0_i32, %c0_i32_0 : i32, i32, i32
  }
  func.func @transform_1(%arg0: i32) -> (i32, i32, i32) {
    %c0_i32 = arith.constant 0 : i32
    %c0_i32_0 = arith.constant 0 : i32
    %c0_i32_1 = arith.constant 0 : i32
    return %arg0, %c0_i32, %c0_i32_0 : i32, i32, i32
  }
  func.func @transform_2(%arg0: i32) -> (i32, i32) {
    %c0_i32 = arith.constant 0 : i32
    %c0_i32_0 = arith.constant 0 : i32
    %c0_i32_1 = arith.constant 0 : i32
    return %c0_i32, %c0_i32_0 : i32, i32
  }
  func.func @transform_3(%arg0: i32) -> (i32, i32) {
    %c0_i32 = arith.constant 0 : i32
    %c0_i32_0 = arith.constant 0 : i32
    %c0_i32_1 = arith.constant 0 : i32
    return %c0_i32, %c0_i32_0 : i32, i32
  }
  func.func @transform_4(%arg0: i32) -> (i32, i32) {
    %c0_i32 = arith.constant 0 : i32
    %c0_i32_0 = arith.constant 0 : i32
    %c0_i32_1 = arith.constant 0 : i32
    return %c0_i32, %c0_i32_0 : i32, i32
  }
  func.func @transform_5(%arg0: i32) -> (i32, i32) {
    %c0_i32 = arith.constant 0 : i32
    %c0_i32_0 = arith.constant 0 : i32
    %c0_i32_1 = arith.constant 0 : i32
    return %c0_i32, %c0_i32_0 : i32, i32
  }
  func.func @transform_6(%arg0: i32) -> (i32, i32) {
    %c0_i32 = arith.constant 0 : i32
    %c0_i32_0 = arith.constant 0 : i32
    %c0_i32_1 = arith.constant 0 : i32
    return %c0_i32, %c0_i32_0 : i32, i32
  }
  func.func @transform_7(%arg0: i32) -> (i32, i32) {
    %c0_i32 = arith.constant 0 : i32
    %c0_i32_0 = arith.constant 0 : i32
    %c0_i32_1 = arith.constant 0 : i32
    return %c0_i32, %c0_i32_0 : i32, i32
  }
  func.func @transform_8(%arg0: i32) -> (i32, i32, i32) {
    %c0_i32 = arith.constant 0 : i32
    %c0_i32_0 = arith.constant 0 : i32
    %c0_i32_1 = arith.constant 0 : i32
    return %arg0, %c0_i32, %c0_i32_0 : i32, i32, i32
  }
  func.func @transform_9(%arg0: i32) -> (i32, i32, i32) {
    %c0_i32 = arith.constant 0 : i32
    %c0_i32_0 = arith.constant 0 : i32
    %c0_i32_1 = arith.constant 0 : i32
    return %arg0, %c0_i32, %c0_i32_0 : i32, i32, i32
  }
}

</mosaic_0001>

<llo_original>
// kernel: fused_forward.1
$region0: #{fused_forward.1}
  #allocation0 [shape = 'u32[]', space=smem, size = 0x4, offset = 0x4, fixed_abs, tag = 'smem constant byte address 0x4 - core index']
  #allocation1 [shape = 'u32[144,128]{1,0:T(1,128)}', space=vmem, size = 0x12000, scoped, tag = 'internal scratch']
  #allocation2 [shape = 'f32[72,256]{1,0:T(8,128)}', space=vmem, size = 0x12000, scoped, tag = 'scratch operand']
  %s0 = inlined_call_operand.vmem [shape: f32[2,75,256], index: 0, kind: input, shape index: {}]
  %s1 = inlined_call_operand.vmem [shape: f32[2,3,1089], index: 1, kind: input, shape index: {}]
  %s2 = inlined_call_operand.vmem [shape: f32[8,75], index: 2, kind: input, shape index: {}]
  %s3 = inlined_call_operand.vmem [shape: f32[8,1], index: 3, kind: input, shape index: {}]
  %s4 = inlined_call_operand.vmem [shape: f32[12,3], index: 4, kind: input, shape index: {}]
  %s5 = inlined_call_operand.vmem [shape: f32[12,1], index: 5, kind: input, shape index: {}]
  %s6 = inlined_call_operand.vmem [shape: f32[85,72], index: 6, kind: input, shape index: {}]
  %s7 = inlined_call_operand.vmem [shape: f32[85,1], index: 7, kind: input, shape index: {}]
  %s8 = inlined_call_operand.vmem [shape: f32[2,85,256], index: 8, kind: output, shape index: {0}]
  %s9 = inlined_call_operand.vmem [shape: f32[2,12,1089], index: 9, kind: output, shape index: {1}]
  %10 = xla_tuple %s8, %s9
  %s11 = sld [smem:[#allocation0]]
  $region73: #{fused_forward.1} parent=0
    _
  %s13 = ssub.s32 1, %s11
  %s14 = scalar_select 0, %s13, %s11
  loop: start=0, step=1, limit=4
  $region2: #{fused_forward.1} parent=0 // loop_pre_header
    _
  $region3: #{fused_forward.1} parent=0 // loop_header
    %s16 = sphi 0, %s20
    %p17 = scmp.ge.s32.totalorder %s16, 4
    %s26 = sphi 0, %s28
    %s29 = sphi 0, %s26
    %s30 = sphi 0, %s29
    %s46 = sphi 0, %s30
    %s52 = sphi 0, %s54
    %s55 = sphi 0, %s52
    %s56 = sphi 0, %s55
    %s72 = sphi 0, %s56
    %s76 = sphi 0, %s76
    %s78 = sphi 0, %s76
    %s79 = sphi 0, %s78
    %s93 = sphi 0, %s79
    %s97 = sphi 0, %s97
    %s99 = sphi 0, %s97
    %s100 = sphi 0, %s99
    %s114 = sphi 0, %s100
    %s118 = sphi 0, %s118
    %s120 = sphi 0, %s118
    %s121 = sphi 0, %s120
    %s135 = sphi 0, %s121
    %s139 = sphi 0, %s139
    %s141 = sphi 0, %s139
    %s142 = sphi 0, %s141
    %s156 = sphi 0, %s142
    %s160 = sphi 0, %s160
    %s162 = sphi 0, %s160
    %s163 = sphi 0, %s162
    %s177 = sphi 0, %s163
    %s181 = sphi 0, %s181
    %s183 = sphi 0, %s181
    %s184 = sphi 0, %s183
    %s198 = sphi 0, %s184
    %s204 = sphi 0, %s206
    %s207 = sphi 0, %s204
    %s208 = sphi 0, %s207
    %s224 = sphi 0, %s208
    %s230 = sphi 0, %s232
    %s233 = sphi 0, %s230
    %s234 = sphi 0, %s233
    %s250 = sphi 0, %s234
  $region4: #{fused_forward.1} parent=0 // loop_header_branch
    %19 = sbr.rel (%p17) target = $region8
  $region5: #{fused_forward.1} parent=0 // loop_body
    %s21 = ssub.s32 %s16, 1
    %s22 = ssub.s32 %s16, 2
    %s23 = sadd.s32 %s16, 1
    %s24 = ssub.s32 %s16, %s23
    %p25 = scmp.eq.s32.totalorder %s24, 0
    %s27 = sadd.s32 %s26, 1
    %s28 = scalar_select %p25, %s26, %s27
    %p31 = pneg %p25
    %p32 = scmp.eq.s32.totalorder %s16, 1
    %p33 = por %p31, %p32
    %p34 = scmp.ne.s32.totalorder %s26, %s29
    %p35 = scmp.eq.s32.totalorder %s16, 0
    %p36 = por %p34, %p35
    %p37 = scmp.ne.s32.totalorder %s26, %s29
    %p38 = scmp.eq.s32.totalorder %s21, 1
    %p39 = por %p37, %p38
    %p40 = scmp.ne.s32.totalorder %s29, %s30
    %p41 = scmp.eq.s32.totalorder %s21, 0
    %p42 = por %p40, %p41
    %p43 = scmp.ne.s32.totalorder %s29, %s30
    %p44 = scmp.eq.s32.totalorder %s22, 1
    %p45 = por %p43, %p44
    %p47 = scmp.ne.s32.totalorder %s30, %s46
    %p48 = scmp.eq.s32.totalorder %s22, 0
    %p49 = por %p47, %p48
    %s50 = ssub.s32 %s16, %s23
    %p51 = scmp.eq.s32.totalorder %s50, 0
    %s53 = sadd.s32 %s52, 1
    %s54 = scalar_select %p51, %s52, %s53
    %p57 = pneg %p51
    %p58 = scmp.eq.s32.totalorder %s16, 1
    %p59 = por %p57, %p58
    %p60 = scmp.ne.s32.totalorder %s52, %s55
    %p61 = scmp.eq.s32.totalorder %s16, 0
    %p62 = por %p60, %p61
    %p63 = scmp.ne.s32.totalorder %s52, %s55
    %p64 = scmp.eq.s32.totalorder %s21, 1
    %p65 = por %p63, %p64
    %p66 = scmp.ne.s32.totalorder %s55, %s56
    %p67 = scmp.eq.s32.totalorder %s21, 0
    %p68 = por %p66, %p67
    %p69 = scmp.ne.s32.totalorder %s55, %s56
    %p70 = scmp.eq.s32.totalorder %s22, 1
    %p71 = por %p69, %p70
    %p73 = scmp.ne.s32.totalorder %s56, %s72
    %p74 = scmp.eq.s32.totalorder %s22, 0
    %p75 = por %p73, %p74
    %s77 = sadd.s32 %s76, 1
    %p80 = scmp.eq.s32.totalorder %s16, 1
    %p81 = scmp.ne.s32.totalorder %s76, %s78
    %p82 = scmp.eq.s32.totalorder %s16, 0
    %p83 = por %p81, %p82
    %p84 = scmp.ne.s32.totalorder %s76, %s78
    %p85 = scmp.eq.s32.totalorder %s21, 1
    %p86 = por %p84, %p85
    %p87 = scmp.ne.s32.totalorder %s78, %s79
    %p88 = scmp.eq.s32.totalorder %s21, 0
    %p89 = por %p87, %p88
    %p90 = scmp.ne.s32.totalorder %s78, %s79
    %p91 = scmp.eq.s32.totalorder %s22, 1
    %p92 = por %p90, %p91
    %p94 = scmp.ne.s32.totalorder %s79, %s93
    %p95 = scmp.eq.s32.totalorder %s22, 0
    %p96 = por %p94, %p95
    %s98 = sadd.s32 %s97, 1
    %p101 = scmp.eq.s32.totalorder %s16, 1
    %p102 = scmp.ne.s32.totalorder %s97, %s99
    %p103 = scmp.eq.s32.totalorder %s16, 0
    %p104 = por %p102, %p103
    %p105 = scmp.ne.s32.totalorder %s97, %s99
    %p106 = scmp.eq.s32.totalorder %s21, 1
    %p107 = por %p105, %p106
    %p108 = scmp.ne.s32.totalorder %s99, %s100
    %p109 = scmp.eq.s32.totalorder %s21, 0
    %p110 = por %p108, %p109
    %p111 = scmp.ne.s32.totalorder %s99, %s100
    %p112 = scmp.eq.s32.totalorder %s22, 1
    %p113 = por %p111, %p112
    %p115 = scmp.ne.s32.totalorder %s100, %s114
    %p116 = scmp.eq.s32.totalorder %s22, 0
    %p117 = por %p115, %p116
    %s119 = sadd.s32 %s118, 1
    %p122 = scmp.eq.s32.totalorder %s16, 1
    %p123 = scmp.ne.s32.totalorder %s118, %s120
    %p124 = scmp.eq.s32.totalorder %s16, 0
    %p125 = por %p123, %p124
    %p126 = scmp.ne.s32.totalorder %s118, %s120
    %p127 = scmp.eq.s32.totalorder %s21, 1
    %p128 = por %p126, %p127
    %p129 = scmp.ne.s32.totalorder %s120, %s121
    %p130 = scmp.eq.s32.totalorder %s21, 0
    %p131 = por %p129, %p130
    %p132 = scmp.ne.s32.totalorder %s120, %s121
    %p133 = scmp.eq.s32.totalorder %s22, 1
    %p134 = por %p132, %p133
    %p136 = scmp.ne.s32.totalorder %s121, %s135
    %p137 = scmp.eq.s32.totalorder %s22, 0
    %p138 = por %p136, %p137
    %s140 = sadd.s32 %s139, 1
    %p143 = scmp.eq.s32.totalorder %s16, 1
    %p144 = scmp.ne.s32.totalorder %s139, %s141
    %p145 = scmp.eq.s32.totalorder %s16, 0
    %p146 = por %p144, %p145
    %p147 = scmp.ne.s32.totalorder %s139, %s141
    %p148 = scmp.eq.s32.totalorder %s21, 1
    %p149 = por %p147, %p148
    %p150 = scmp.ne.s32.totalorder %s141, %s142
    %p151 = scmp.eq.s32.totalorder %s21, 0
    %p152 = por %p150, %p151
    %p153 = scmp.ne.s32.totalorder %s141, %s142
    %p154 = scmp.eq.s32.totalorder %s22, 1
    %p155 = por %p153, %p154
    %p157 = scmp.ne.s32.totalorder %s142, %s156
    %p158 = scmp.eq.s32.totalorder %s22, 0
    %p159 = por %p157, %p158
    %s161 = sadd.s32 %s160, 1
    %p164 = scmp.eq.s32.totalorder %s16, 1
    %p165 = scmp.ne.s32.totalorder %s160, %s162
    %p166 = scmp.eq.s32.totalorder %s16, 0
    %p167 = por %p165, %p166
    %p168 = scmp.ne.s32.totalorder %s160, %s162
    %p169 = scmp.eq.s32.totalorder %s21, 1
    %p170 = por %p168, %p169
    %p171 = scmp.ne.s32.totalorder %s162, %s163
    %p172 = scmp.eq.s32.totalorder %s21, 0
    %p173 = por %p171, %p172
    %p174 = scmp.ne.s32.totalorder %s162, %s163
    %p175 = scmp.eq.s32.totalorder %s22, 1
    %p176 = por %p174, %p175
    %p178 = scmp.ne.s32.totalorder %s163, %s177
    %p179 = scmp.eq.s32.totalorder %s22, 0
    %p180 = por %p178, %p179
    %s182 = sadd.s32 %s181, 1
    %p185 = scmp.eq.s32.totalorder %s16, 1
    %p186 = scmp.ne.s32.totalorder %s181, %s183
    %p187 = scmp.eq.s32.totalorder %s16, 0
    %p188 = por %p186, %p187
    %p189 = scmp.ne.s32.totalorder %s181, %s183
    %p190 = scmp.eq.s32.totalorder %s21, 1
    %p191 = por %p189, %p190
    %p192 = scmp.ne.s32.totalorder %s183, %s184
    %p193 = scmp.eq.s32.totalorder %s21, 0
    %p194 = por %p192, %p193
    %p195 = scmp.ne.s32.totalorder %s183, %s184
    %p196 = scmp.eq.s32.totalorder %s22, 1
    %p197 = por %p195, %p196
    %p199 = scmp.ne.s32.totalorder %s184, %s198
    %p200 = scmp.eq.s32.totalorder %s22, 0
    %p201 = por %p199, %p200
    %s202 = ssub.s32 %s16, %s23
    %p203 = scmp.eq.s32.totalorder %s202, 0
    %s205 = sadd.s32 %s204, 1
    %s206 = scalar_select %p203, %s204, %s205
    %p209 = pneg %p203
    %p210 = scmp.eq.s32.totalorder %s16, 1
    %p211 = por %p209, %p210
    %p212 = scmp.ne.s32.totalorder %s204, %s207
    %p213 = scmp.eq.s32.totalorder %s16, 0
    %p214 = por %p212, %p213
    %p215 = scmp.ne.s32.totalorder %s204, %s207
    %p216 = scmp.eq.s32.totalorder %s21, 1
    %p217 = por %p215, %p216
    %p218 = scmp.ne.s32.totalorder %s207, %s208
    %p219 = scmp.eq.s32.totalorder %s21, 0
    %p220 = por %p218, %p219
    %p221 = scmp.ne.s32.totalorder %s207, %s208
    %p222 = scmp.eq.s32.totalorder %s22, 1
    %p223 = por %p221, %p222
    %p225 = scmp.ne.s32.totalorder %s208, %s224
    %p226 = scmp.eq.s32.totalorder %s22, 0
    %p227 = por %p225, %p226
    %s228 = ssub.s32 %s16, %s23
    %p229 = scmp.eq.s32.totalorder %s228, 0
    %s231 = sadd.s32 %s230, 1
    %s232 = scalar_select %p229, %s230, %s231
    %p235 = pneg %p229
    %p236 = scmp.eq.s32.totalorder %s16, 1
    %p237 = por %p235, %p236
    %p238 = scmp.ne.s32.totalorder %s230, %s233
    %p239 = scmp.eq.s32.totalorder %s16, 0
    %p240 = por %p238, %p239
    %p241 = scmp.ne.s32.totalorder %s230, %s233
    %p242 = scmp.eq.s32.totalorder %s21, 1
    %p243 = por %p241, %p242
    %p244 = scmp.ne.s32.totalorder %s233, %s234
    %p245 = scmp.eq.s32.totalorder %s21, 0
    %p246 = por %p244, %p245
    %p247 = scmp.ne.s32.totalorder %s233, %s234
    %p248 = scmp.eq.s32.totalorder %s22, 1
    %p249 = por %p247, %p248
    %p251 = scmp.ne.s32.totalorder %s234, %s250
    %p252 = scmp.eq.s32.totalorder %s22, 0
    %p253 = por %p251, %p252
    %p254 = scmp.le.s32.totalorder 1, %s16
    %p255 = scmp.lt.s32.totalorder %s16, 3
    %p256 = pnand %p254, %p255
    %p257 = pneg %p256
    // Predicated region
    $region9: #{fused_forward.1} parent=5 // pred_check
      _
    $region10: #{fused_forward.1} parent=5 // pred_check_branch
      %259 = sbr.rel (%p256) target = $region12
    $region11: #{fused_forward.1} parent=5 // pred_region
      %s260 = ssub.s32 %s16, 1
      // Predicated region
      $region13: #{fused_forward.1} parent=11 // pred_check
        %p261 = pneg %p89
      $region14: #{fused_forward.1} parent=11 // pred_check_branch
        %263 = sbr.rel (%p261) target = $region16
      $region15: #{fused_forward.1} parent=11 // pred_region
        _
      $region16: #{fused_forward.1} parent=11 // pred_fallthru
        _
      // Predicated region
      $region17: #{fused_forward.1} parent=11 // pred_check
        %p264 = pneg %p110
      $region18: #{fused_forward.1} parent=11 // pred_check_branch
        %266 = sbr.rel (%p264) target = $region20
      $region19: #{fused_forward.1} parent=11 // pred_region
        _
      $region20: #{fused_forward.1} parent=11 // pred_fallthru
        _
      // Predicated region
      $region21: #{fused_forward.1} parent=11 // pred_check
        %p267 = pneg %p131
      $region22: #{fused_forward.1} parent=11 // pred_check_branch
        %269 = sbr.rel (%p267) target = $region24
      $region23: #{fused_forward.1} parent=11 // pred_region
        _
      $region24: #{fused_forward.1} parent=11 // pred_fallthru
        _
      // Predicated region
      $region25: #{fused_forward.1} parent=11 // pred_check
        %p270 = pneg %p152
      $region26: #{fused_forward.1} parent=11 // pred_check_branch
        %272 = sbr.rel (%p270) target = $region28
      $region27: #{fused_forward.1} parent=11 // pred_region
        _
      $region28: #{fused_forward.1} parent=11 // pred_fallthru
        _
      // Predicated region
      $region29: #{fused_forward.1} parent=11 // pred_check
        %p273 = pneg %p173
      $region30: #{fused_forward.1} parent=11 // pred_check_branch
        %275 = sbr.rel (%p273) target = $region32
      $region31: #{fused_forward.1} parent=11 // pred_region
        _
      $region32: #{fused_forward.1} parent=11 // pred_fallthru
        _
      // Predicated region
      $region33: #{fused_forward.1} parent=11 // pred_check
        %p276 = pneg %p194
      $region34: #{fused_forward.1} parent=11 // pred_check_branch
        %278 = sbr.rel (%p276) target = $region36
      $region35: #{fused_forward.1} parent=11 // pred_region
        _
      $region36: #{fused_forward.1} parent=11 // pred_fallthru
        _
    $region12: #{fused_forward.1} parent=5 // pred_fallthru
      _
    %p279 = scmp.lt.s32.totalorder %s16, 2
    // Predicated region
    $region37: #{fused_forward.1} parent=5 // pred_check
      %p280 = pneg %p279
    $region38: #{fused_forward.1} parent=5 // pred_check_branch
      %282 = sbr.rel (%p280) target = $region40
    $region39: #{fused_forward.1} parent=5 // pred_region
      // Predicated region
      $region41: #{fused_forward.1} parent=39 // pred_check
        %p283 = pneg %p36
      $region42: #{fused_forward.1} parent=39 // pred_check_branch
        %285 = sbr.rel (%p283) target = $region44
      $region43: #{fused_forward.1} parent=39 // pred_region
        %p286 = scmp.lt.s32.totalorder %s16, 1
        %s287 = scalar_select %p286, %s16, 1
        %s288 = smul.addr %s287, 20
        %s289 = smul.addr %s288, 8
        %s290 = scalar_lea.vmem %s0, %s289
      $region44: #{fused_forward.1} parent=39 // pred_fallthru
        _
      // Predicated region
      $region45: #{fused_forward.1} parent=39 // pred_check
        %p291 = pneg %p62
      $region46: #{fused_forward.1} parent=39 // pred_check_branch
        %293 = sbr.rel (%p291) target = $region48
      $region47: #{fused_forward.1} parent=39 // pred_region
        %p294 = scmp.lt.s32.totalorder %s16, 1
        %s295 = scalar_select %p294, %s16, 1
        %s296 = smul.addr %s295, 9
        %s297 = smul.addr %s296, 4
        %s298 = scalar_lea.vmem %s1, %s297
      $region48: #{fused_forward.1} parent=39 // pred_fallthru
        _
    $region40: #{fused_forward.1} parent=5 // pred_fallthru
      _
    %p299 = scmp.le.s32.totalorder 1, %s16
    %p300 = scmp.lt.s32.totalorder %s16, 3
    %p301 = pnand %p299, %p300
    %p302 = pneg %p301
    // Predicated region
    $region49: #{fused_forward.1} parent=5 // pred_check
      _
    $region50: #{fused_forward.1} parent=5 // pred_check_branch
      %304 = sbr.rel (%p301) target = $region52
    $region51: #{fused_forward.1} parent=5 // pred_region
      %s305 = ssub.s32 %s16, 1
      %p306 = scmp.lt.s32.totalorder %s21, 1
      %s307 = scalar_select %p306, %s21, 1
      %s308 = smul.addr %s307, 20
      %s309 = smul.addr %s308, 8
      %s310 = scalar_lea.vmem %s0, %s309
      %p311 = pneg %p42
      %p312 = pneg %p39
      %p313 = scmp.lt.s32.totalorder %s21, 1
      %s314 = scalar_select %p313, %s21, 1
      %s315 = smul.addr %s314, 9
      %s316 = smul.addr %s315, 4
      %s317 = scalar_lea.vmem %s1, %s316
      %p318 = pneg %p68
      %p319 = pneg %p65
      %p320 = pneg %p89
      %p321 = pneg %p86
      %p322 = pneg %p110
      %p323 = pneg %p107
      %p324 = pneg %p131
      %p325 = pneg %p128
      %p326 = pneg %p152
      %p327 = pneg %p149
      %p328 = pneg %p173
      %p329 = pneg %p170
      %p330 = pneg %p194
      %p331 = pneg %p191
      %p332 = pneg %p220
      %p333 = pneg %p217
      %p334 = scmp.lt.s32.totalorder %s21, 1
      %s335 = scalar_select %p334, %s21, 1
      %s336 = smul.addr %s335, 22
      %s337 = smul.addr %s336, 8
      %s338 = scalar_lea.vmem %s8, %s337
      %p339 = pneg %p246
      %p340 = pneg %p243
      %p341 = scmp.lt.s32.totalorder %s21, 1
      %s342 = scalar_select %p341, %s21, 1
      %s343 = smul.addr %s342, 18
      %s344 = smul.addr %s343, 8
      %s345 = scalar_lea.vmem %s9, %s344
      %p346 = scmp.lt.s32.totalorder %s21, 1
      %s347 = scalar_select %p346, %s21, 1
      %s348 = smul.addr %s347, 20
      %s349 = smul.addr %s348, 8
      %s350 = scalar_lea.vmem %s0, %s349
      %p351 = scmp.lt.s32.totalorder %s21, 1
      %s352 = scalar_select %p351, %s21, 1
      %s353 = smul.addr %s352, 9
      %s354 = smul.addr %s353, 4
      %s355 = scalar_lea.vmem %s1, %s354
      %p356 = scmp.lt.s32.totalorder %s21, 1
      %s357 = scalar_select %p356, %s21, 1
      %s358 = smul.addr %s357, 22
      %s359 = smul.addr %s358, 8
      %s360 = scalar_lea.vmem %s8, %s359
      %p361 = scmp.lt.s32.totalorder %s21, 1
      %s362 = scalar_select %p361, %s21, 1
      %s363 = smul.addr %s362, 18
      %s364 = smul.addr %s363, 8
      %s365 = scalar_lea.vmem %s9, %s364
      %v366 = vld [vmem:[%s2] sm:$0xff]
      %v367 = vld [vmem:[%s350] sm:$0xff]
      %v368 = vld [vmem:[%s350 + $0x8] sm:$0xff]
      %v369 = vld [vmem:[%s350 + $0x10] sm:$0xff]
      %v370 = vld [vmem:[%s350 + $0x18] sm:$0xff]
      %v371 = vld [vmem:[%s350 + $0x20] sm:$0xff]
      %v372 = vld [vmem:[%s350 + $0x28] sm:$0xff]
      %v373 = vld [vmem:[%s350 + $0x30] sm:$0xff]
      %v374 = vld [vmem:[%s350 + $0x38] sm:$0xff]
      %v375 = vld [vmem:[%s350 + $0x40] sm:$0xff]
      %v376 = vld [vmem:[%s350 + $0x48] sm:$0xff]
      %v377 = vld [vmem:[%s350 + $0x50] sm:$0xff]
      %v378 = vld [vmem:[%s350 + $0x58] sm:$0xff]
      %v379 = vld [vmem:[%s350 + $0x60] sm:$0xff]
      %v380 = vld [vmem:[%s350 + $0x68] sm:$0xff]
      %v381 = vld [vmem:[%s350 + $0x70] sm:$0xff]
      %v382 = vld [vmem:[%s350 + $0x78] sm:$0xff]
      %v383 = vld [vmem:[%s350 + $0x80] sm:$0xff]
      %v384 = vld [vmem:[%s350 + $0x88] sm:$0xff]
      %v385 = vld [vmem:[%s350 + $0x90] sm:$0x7]
      %v386 = vld [vmem:[%s350 + $0x98] sm:$0x7]
      %v387 = vld [vmem:[%s3] sm:$0xff]
      %389 = vset.pattern.permute.xlu0 0
      %390 = vperm.xlu0 %389, %v387
      %v391 = vpop.permute.xlu0 %390
      %vm393 = vcmask 613376
      %v395 = vsel %vm393, %v366, 0
      %vm397 = vcmask 1042432
      %v399 = vsel %vm397, %v385, 0
      %v402 = vsel %vm397, %v386, 0
      %404 = vmatprep.subr.mxu0 %v368
      %405 = vmatpush1.msra.mxu0 %v367
      %406 = vmatprep.subr.mxu0 %v370
      %407 = vmatpush1.msra.mxu0 %v369
      %408 = vmatprep.subr.mxu0 %v372
      %409 = vmatpush1.msra.mxu0 %v371
      %410 = vmatprep.subr.mxu0 %v374
      %411 = vmatpush1.msra.mxu0 %v373
      %412 = vmatprep.subr.mxu0 %v376
      %413 = vmatpush1.msra.mxu0 %v375
      %414 = vmatprep.subr.mxu0 %v378
      %415 = vmatpush1.msra.mxu0 %v377
      %416 = vmatprep.subr.mxu0 %v380
      %417 = vmatpush1.msra.mxu0 %v379
      %418 = vmatprep.subr.mxu0 %v382
      %419 = vmatpush1.msra.mxu0 %v381
      %420 = vmatprep.subr.mxu0 %v384
      %421 = vmatpush1.msra.mxu0 %v383
      %422 = vmatprep.subr.mxu0 %v402
      %423 = vmatpush1.msra.mxu0 %v399
      %424 = vmatprep.subr.mxu0 0.0
      %425 = vmatpush1.msra.mxu0 0.0
      %426 = vmatprep.subr.mxu0 0.0
      %427 = vmatpush1.msra.mxu0 0.0
      %428 = vmatprep.subr.mxu0 0.0
      %429 = vmatpush1.msra.mxu0 0.0
      %430 = vmatprep.subr.mxu0 0.0
      %431 = vmatpush1.msra.mxu0 0.0
      %432 = vmatprep.subr.mxu0 0.0
      %433 = vmatpush1.msra.mxu0 0.0
      %434 = vmatprep.subr.mxu0 0.0
      %435 = vmatpush1.msra.mxu0 0.0
      %436 = vmatprep.subr.mxu0 0.0
      %437 = vmatpush1.msra.mxu0 0.0
      %438 = vmatprep.subr.mxu0 0.0
      %439 = vmatpush1.msra.mxu0 0.0
      %440 = vmatprep.subr.mxu0 0.0
      %441 = vmatpush1.msra.mxu0 0.0
      %442 = vmatprep.subr.mxu0 0.0
      %443 = vmatpush1.msra.mxu0 0.0
      %444 = vmatprep.subr.mxu0 0.0
      %445 = vmatpush1.msra.mxu0 0.0
      %446 = vmatprep.subr.mxu0 0.0
      %447 = vmatpush1.msra.mxu0 0.0
      %448 = vmatprep.subr.mxu0 0.0
      %449 = vmatpush1.msra.mxu0 0.0
      %450 = vmatprep.subr.mxu0 0.0
      %451 = vmatpush1.msra.mxu0 0.0
      %452 = vmatprep.subr.mxu0 0.0
      %453 = vmatpush1.msra.mxu0 0.0
      %454 = vmatprep.subr.mxu0 0.0
      %455 = vmatpush1.msra.mxu0 0.0
      %456 = vmatprep.subr.mxu0 0.0
      %457 = vmatpush1.msra.mxu0 0.0
      %458 = vmatprep.subr.mxu0 0.0
      %459 = vmatpush1.msra.mxu0 0.0
      %460 = vmatprep.subr.mxu0 0.0
      %461 = vmatpush1.msra.mxu0 0.0
      %462 = vmatprep.subr.mxu0 0.0
      %463 = vmatpush1.msra.mxu0 0.0
      %464 = vmatprep.subr.mxu0 0.0
      %465 = vmatpush1.msra.mxu0 0.0
      %466 = vmatprep.subr.mxu0 0.0
      %467 = vmatpush1.msra.mxu0 0.0
      %468 = vmatprep.mubr.f32.mxu0 0.0
      %469 = vmatmul.mubr.f32.gmra.mrb[0].mxu0 %v395
      %v470 = vpop.f32.mrb[0].mxu0
      %v471 = vadd.f32 %v391, %v470
      %v472 = vpop.f32.mrb[0].mxu0
      %v473 = vadd.f32 %v391, %v472
      %474 = vdwg.mxu0
      %v475 = vmul.f32 %v471, 0.5
      %v476 = vmul.f32 %v473, 0.5
      %v477 = vmul.f32 %v471, 0.70710677
      %v478 = vmul.f32 %v473, 0.70710677
      %v479 = verf.f32.pop %v477
      %v480 = verf.f32.pop %v478
      %v481 = vadd.f32 %v479, 1.0
      %v482 = vadd.f32 %v480, 1.0
      %v483 = vmul.f32 %v475, %v481
      %v484 = vmul.f32 %v476, %v482
      %v485 = vld [vmem:[%s5] sm:$0xff]
      %v486 = vld [vmem:[%s5 + $0x8] sm:$0xf]
      %v487 = vld [vmem:[%s4] sm:$0xff]
      %v488 = vld [vmem:[%s4 + $0x8] sm:$0xf]
      %v489 = vld [vmem:[%s355] ss:$4 sm:$0xff]
      %s490 = scalar_lea.vmem %s355, 32
      %v491 = vld [vmem:[%s490] ss:$4 sm:$0x1]
      %493 = vset.pattern.permute.xlu0 0
      %494 = vperm.xlu0 %493, %v487
      %v495 = vpop.permute.xlu0 %494
      %498 = vset.pattern.permute.xlu0 0
      %499 = vperm.xlu0 %498, %v488
      %v500 = vpop.permute.xlu0 %499
      %v504 = vlaneseq
      %v505 = vshrl.u32 %v504, 7
      %v506 = vsub.s32 0, %v505
      %v507 = vrot.slane %v489, %v506
      %v508 = vlaneseq
      %v509 = vshrl.u32 %v508, 7
      %v510 = vsub.s32 1, %v509
      %v511 = vrot.slane %v489, %v510
      %v512 = vlaneseq
      %v513 = vshrl.u32 %v512, 7
      %v514 = vsub.s32 2, %v513
      %v515 = vrot.slane %v489, %v514
      %v516 = vlaneseq
      %v517 = vshrl.u32 %v516, 7
      %v518 = vsub.s32 3, %v517
      %v519 = vrot.slane %v489, %v518
      %v520 = vlaneseq
      %v521 = vshrl.u32 %v520, 7
      %v522 = vsub.s32 4, %v521
      %v523 = vrot.slane %v489, %v522
      %v524 = vlaneseq
      %v525 = vshrl.u32 %v524, 7
      %v526 = vsub.s32 5, %v525
      %v527 = vrot.slane %v489, %v526
      %v528 = vlaneseq
      %v529 = vshrl.u32 %v528, 7
      %v530 = vsub.s32 6, %v529
      %v531 = vrot.slane %v489, %v530
      %v532 = vlaneseq
      %v533 = vshrl.u32 %v532, 7
      %v534 = vsub.s32 7, %v533
      %v535 = vrot.slane %v489, %v534
      %v536 = vlaneseq
      %v537 = vshrl.u32 %v536, 7
      %v538 = vsub.s32 0, %v537
      %v539 = vrot.slane %v491, %v538
      %v549 = vmul.f32 %v495, %v507
      %v550 = vmul.f32 %v495, %v511
      %v551 = vmul.f32 %v495, %v515
      %v552 = vmul.f32 %v495, %v519
      %v553 = vmul.f32 %v495, %v523
      %v554 = vmul.f32 %v495, %v527
      %v555 = vmul.f32 %v495, %v531
      %v556 = vmul.f32 %v495, %v535
      %v557 = vmul.f32 %v495, %v539
      %v558 = vmul.f32 %v500, %v507
      %v559 = vmul.f32 %v500, %v511
      %v560 = vmul.f32 %v500, %v515
      %v561 = vmul.f32 %v500, %v519
      %v562 = vmul.f32 %v500, %v523
      %v563 = vmul.f32 %v500, %v527
      %v564 = vmul.f32 %v500, %v531
      %v565 = vmul.f32 %v500, %v535
      %v566 = vmul.f32 %v500, %v539
      %568 = vset.pattern.permute.xlu0 0
      %569 = vperm.xlu0 %568, %v485
      %v570 = vpop.permute.xlu0 %569
      %573 = vset.pattern.permute.xlu0 0
      %574 = vperm.xlu0 %573, %v486
      %v575 = vpop.permute.xlu0 %574
      %v577 = vadd.f32 %v570, %v549
      %v578 = vadd.f32 %v570, %v550
      %v579 = vadd.f32 %v570, %v551
      %v580 = vadd.f32 %v570, %v552
      %v581 = vadd.f32 %v570, %v553
      %v582 = vadd.f32 %v570, %v554
      %v583 = vadd.f32 %v570, %v555
      %v584 = vadd.f32 %v570, %v556
      %v585 = vadd.f32 %v570, %v557
      %v586 = vadd.f32 %v575, %v558
      %v587 = vadd.f32 %v575, %v559
      %v588 = vadd.f32 %v575, %v560
      %v589 = vadd.f32 %v575, %v561
      %v590 = vadd.f32 %v575, %v562
      %v591 = vadd.f32 %v575, %v563
      %v592 = vadd.f32 %v575, %v564
      %v593 = vadd.f32 %v575, %v565
      %v594 = vadd.f32 %v575, %v566
      %s595 = scalar_lea.vmem %s355, 1
      %v596 = vld [vmem:[%s595] ss:$4 sm:$0xff]
      %s597 = scalar_lea.vmem %s355, 33
      %v598 = vld [vmem:[%s597] ss:$4 sm:$0x1]
      %599 = vset.pattern.permute.xlu0 1
      %600 = vperm.xlu0 %599, %v487
      %v601 = vpop.permute.xlu0 %600
      %603 = vset.pattern.permute.xlu0 1
      %604 = vperm.xlu0 %603, %v488
      %v605 = vpop.permute.xlu0 %604
      %v609 = vlaneseq
      %v610 = vshrl.u32 %v609, 7
      %v611 = vsub.s32 0, %v610
      %v612 = vrot.slane %v596, %v611
      %v613 = vlaneseq
      %v614 = vshrl.u32 %v613, 7
      %v615 = vsub.s32 1, %v614
      %v616 = vrot.slane %v596, %v615
      %v617 = vlaneseq
      %v618 = vshrl.u32 %v617, 7
      %v619 = vsub.s32 2, %v618
      %v620 = vrot.slane %v596, %v619
      %v621 = vlaneseq
      %v622 = vshrl.u32 %v621, 7
      %v623 = vsub.s32 3, %v622
      %v624 = vrot.slane %v596, %v623
      %v625 = vlaneseq
      %v626 = vshrl.u32 %v625, 7
      %v627 = vsub.s32 4, %v626
      %v628 = vrot.slane %v596, %v627
      %v629 = vlaneseq
      %v630 = vshrl.u32 %v629, 7
      %v631 = vsub.s32 5, %v630
      %v632 = vrot.slane %v596, %v631
      %v633 = vlaneseq
      %v634 = vshrl.u32 %v633, 7
      %v635 = vsub.s32 6, %v634
      %v636 = vrot.slane %v596, %v635
      %v637 = vlaneseq
      %v638 = vshrl.u32 %v637, 7
      %v639 = vsub.s32 7, %v638
      %v640 = vrot.slane %v596, %v639
      %v641 = vlaneseq
      %v642 = vshrl.u32 %v641, 7
      %v643 = vsub.s32 0, %v642
      %v644 = vrot.slane %v598, %v643
      %v654 = vmul.f32 %v601, %v612
      %v655 = vmul.f32 %v601, %v616
      %v656 = vmul.f32 %v601, %v620
      %v657 = vmul.f32 %v601, %v624
      %v658 = vmul.f32 %v601, %v628
      %v659 = vmul.f32 %v601, %v632
      %v660 = vmul.f32 %v601, %v636
      %v661 = vmul.f32 %v601, %v640
      %v662 = vmul.f32 %v601, %v644
      %v663 = vmul.f32 %v605, %v612
      %v664 = vmul.f32 %v605, %v616
      %v665 = vmul.f32 %v605, %v620
      %v666 = vmul.f32 %v605, %v624
      %v667 = vmul.f32 %v605, %v628
      %v668 = vmul.f32 %v605, %v632
      %v669 = vmul.f32 %v605, %v636
      %v670 = vmul.f32 %v605, %v640
      %v671 = vmul.f32 %v605, %v644
      %v672 = vadd.f32 %v577, %v654
      %v673 = vadd.f32 %v578, %v655
      %v674 = vadd.f32 %v579, %v656
      %v675 = vadd.f32 %v580, %v657
      %v676 = vadd.f32 %v581, %v658
      %v677 = vadd.f32 %v582, %v659
      %v678 = vadd.f32 %v583, %v660
      %v679 = vadd.f32 %v584, %v661
      %v680 = vadd.f32 %v585, %v662
      %v681 = vadd.f32 %v586, %v663
      %v682 = vadd.f32 %v587, %v664
      %v683 = vadd.f32 %v588, %v665
      %v684 = vadd.f32 %v589, %v666
      %v685 = vadd.f32 %v590, %v667
      %v686 = vadd.f32 %v591, %v668
      %v687 = vadd.f32 %v592, %v669
      %v688 = vadd.f32 %v593, %v670
      %v689 = vadd.f32 %v594, %v671
      %s690 = scalar_lea.vmem %s355, 2
      %v691 = vld [vmem:[%s690] ss:$4 sm:$0xff]
      %s692 = scalar_lea.vmem %s355, 34
      %v693 = vld [vmem:[%s692] ss:$4 sm:$0x1]
      %694 = vset.pattern.permute.xlu0 2
      %695 = vperm.xlu0 %694, %v487
      %v696 = vpop.permute.xlu0 %695
      %698 = vset.pattern.permute.xlu0 2
      %699 = vperm.xlu0 %698, %v488
      %v700 = vpop.permute.xlu0 %699
      %v704 = vlaneseq
      %v705 = vshrl.u32 %v704, 7
      %v706 = vsub.s32 0, %v705
      %v707 = vrot.slane %v691, %v706
      %v708 = vlaneseq
      %v709 = vshrl.u32 %v708, 7
      %v710 = vsub.s32 1, %v709
      %v711 = vrot.slane %v691, %v710
      %v712 = vlaneseq
      %v713 = vshrl.u32 %v712, 7
      %v714 = vsub.s32 2, %v713
      %v715 = vrot.slane %v691, %v714
      %v716 = vlaneseq
      %v717 = vshrl.u32 %v716, 7
      %v718 = vsub.s32 3, %v717
      %v719 = vrot.slane %v691, %v718
      %v720 = vlaneseq
      %v721 = vshrl.u32 %v720, 7
      %v722 = vsub.s32 4, %v721
      %v723 = vrot.slane %v691, %v722
      %v724 = vlaneseq
      %v725 = vshrl.u32 %v724, 7
      %v726 = vsub.s32 5, %v725
      %v727 = vrot.slane %v691, %v726
      %v728 = vlaneseq
      %v729 = vshrl.u32 %v728, 7
      %v730 = vsub.s32 6, %v729
      %v731 = vrot.slane %v691, %v730
      %v732 = vlaneseq
      %v733 = vshrl.u32 %v732, 7
      %v734 = vsub.s32 7, %v733
      %v735 = vrot.slane %v691, %v734
      %v736 = vlaneseq
      %v737 = vshrl.u32 %v736, 7
      %v738 = vsub.s32 0, %v737
      %v739 = vrot.slane %v693, %v738
      %v749 = vmul.f32 %v696, %v707
      %v750 = vmul.f32 %v696, %v711
      %v751 = vmul.f32 %v696, %v715
      %v752 = vmul.f32 %v696, %v719
      %v753 = vmul.f32 %v696, %v723
      %v754 = vmul.f32 %v696, %v727
      %v755 = vmul.f32 %v696, %v731
      %v756 = vmul.f32 %v696, %v735
      %v757 = vmul.f32 %v696, %v739
      %v758 = vmul.f32 %v700, %v707
      %v759 = vmul.f32 %v700, %v711
      %v760 = vmul.f32 %v700, %v715
      %v761 = vmul.f32 %v700, %v719
      %v762 = vmul.f32 %v700, %v723
      %v763 = vmul.f32 %v700, %v727
      %v764 = vmul.f32 %v700, %v731
      %v765 = vmul.f32 %v700, %v735
      %v766 = vmul.f32 %v700, %v739
      %v767 = vadd.f32 %v672, %v749
      %v768 = vadd.f32 %v673, %v750
      %v769 = vadd.f32 %v674, %v751
      %v770 = vadd.f32 %v675, %v752
      %v771 = vadd.f32 %v676, %v753
      %v772 = vadd.f32 %v677, %v754
      %v773 = vadd.f32 %v678, %v755
      %v774 = vadd.f32 %v679, %v756
      %v775 = vadd.f32 %v680, %v757
      %v776 = vadd.f32 %v681, %v758
      %v777 = vadd.f32 %v682, %v759
      %v778 = vadd.f32 %v683, %v760
      %v779 = vadd.f32 %v684, %v761
      %v780 = vadd.f32 %v685, %v762
      %v781 = vadd.f32 %v686, %v763
      %v782 = vadd.f32 %v687, %v764
      %v783 = vadd.f32 %v688, %v765
      %v784 = vadd.f32 %v689, %v766
      %v785 = vmul.f32 %v767, 0.5
      %v786 = vmul.f32 %v768, 0.5
      %v787 = vmul.f32 %v769, 0.5
      %v788 = vmul.f32 %v770, 0.5
      %v789 = vmul.f32 %v771, 0.5
      %v790 = vmul.f32 %v772, 0.5
      %v791 = vmul.f32 %v773, 0.5
      %v792 = vmul.f32 %v774, 0.5
      %v793 = vmul.f32 %v775, 0.5
      %v794 = vmul.f32 %v776, 0.5
      %v795 = vmul.f32 %v777, 0.5
      %v796 = vmul.f32 %v778, 0.5
      %v797 = vmul.f32 %v779, 0.5
      %v798 = vmul.f32 %v780, 0.5
      %v799 = vmul.f32 %v781, 0.5
      %v800 = vmul.f32 %v782, 0.5
      %v801 = vmul.f32 %v783, 0.5
      %v802 = vmul.f32 %v784, 0.5
      %v803 = vmul.f32 %v767, 0.70710677
      %v804 = vmul.f32 %v768, 0.70710677
      %v805 = vmul.f32 %v769, 0.70710677
      %v806 = vmul.f32 %v770, 0.70710677
      %v807 = vmul.f32 %v771, 0.70710677
      %v808 = vmul.f32 %v772, 0.70710677
      %v809 = vmul.f32 %v773, 0.70710677
      %v810 = vmul.f32 %v774, 0.70710677
      %v811 = vmul.f32 %v775, 0.70710677
      %v812 = vmul.f32 %v776, 0.70710677
      %v813 = vmul.f32 %v777, 0.70710677
      %v814 = vmul.f32 %v778, 0.70710677
      %v815 = vmul.f32 %v779, 0.70710677
      %v816 = vmul.f32 %v780, 0.70710677
      %v817 = vmul.f32 %v781, 0.70710677
      %v818 = vmul.f32 %v782, 0.70710677
      %v819 = vmul.f32 %v783, 0.70710677
      %v820 = vmul.f32 %v784, 0.70710677
      %v821 = verf.f32.pop %v803
      %v822 = verf.f32.pop %v804
      %v823 = verf.f32.pop %v805
      %v824 = verf.f32.pop %v806
      %v825 = verf.f32.pop %v807
      %v826 = verf.f32.pop %v808
      %v827 = verf.f32.pop %v809
      %v828 = verf.f32.pop %v810
      %v829 = verf.f32.pop %v811
      %v830 = verf.f32.pop %v812
      %v831 = verf.f32.pop %v813
      %v832 = verf.f32.pop %v814
      %v833 = verf.f32.pop %v815
      %v834 = verf.f32.pop %v816
      %v835 = verf.f32.pop %v817
      %v836 = verf.f32.pop %v818
      %v837 = verf.f32.pop %v819
      %v838 = verf.f32.pop %v820
      %v839 = vadd.f32 %v821, 1.0
      %v840 = vadd.f32 %v822, 1.0
      %v841 = vadd.f32 %v823, 1.0
      %v842 = vadd.f32 %v824, 1.0
      %v843 = vadd.f32 %v825, 1.0
      %v844 = vadd.f32 %v826, 1.0
      %v845 = vadd.f32 %v827, 1.0
      %v846 = vadd.f32 %v828, 1.0
      %v847 = vadd.f32 %v829, 1.0
      %v848 = vadd.f32 %v830, 1.0
      %v849 = vadd.f32 %v831, 1.0
      %v850 = vadd.f32 %v832, 1.0
      %v851 = vadd.f32 %v833, 1.0
      %v852 = vadd.f32 %v834, 1.0
      %v853 = vadd.f32 %v835, 1.0
      %v854 = vadd.f32 %v836, 1.0
      %v855 = vadd.f32 %v837, 1.0
      %v856 = vadd.f32 %v838, 1.0
      %v857 = vmul.f32 %v785, %v839
      %v858 = vmul.f32 %v786, %v840
      %v859 = vmul.f32 %v787, %v841
      %v860 = vmul.f32 %v788, %v842
      %v861 = vmul.f32 %v789, %v843
      %v862 = vmul.f32 %v790, %v844
      %v863 = vmul.f32 %v791, %v845
      %v864 = vmul.f32 %v792, %v846
      %v865 = vmul.f32 %v793, %v847
      %v866 = vmul.f32 %v794, %v848
      %v867 = vmul.f32 %v795, %v849
      %v868 = vmul.f32 %v796, %v850
      %v869 = vmul.f32 %v797, %v851
      %v870 = vmul.f32 %v798, %v852
      %v871 = vmul.f32 %v799, %v853
      %v872 = vmul.f32 %v800, %v854
      %v873 = vmul.f32 %v801, %v855
      %v874 = vmul.f32 %v802, %v856
      %875 = vst [vmem:[%s365] sm:$0xff] %v857
      %876 = vst [vmem:[%s365 + $0x8] sm:$0xff] %v858
      %877 = vst [vmem:[%s365 + $0x10] sm:$0xff] %v859
      %878 = vst [vmem:[%s365 + $0x18] sm:$0xff] %v860
      %879 = vst [vmem:[%s365 + $0x20] sm:$0xff] %v861
      %880 = vst [vmem:[%s365 + $0x28] sm:$0xff] %v862
      %881 = vst [vmem:[%s365 + $0x30] sm:$0xff] %v863
      %882 = vst [vmem:[%s365 + $0x38] sm:$0xff] %v864
      %vm883 = vcmask 531456
      %884 = vst.msk [vmem:[%s365 + $0x40] sm:$0xff] %vm883, %v865
      %885 = vst [vmem:[%s365 + $0x48] sm:$0xf] %v866
      %886 = vst [vmem:[%s365 + $0x50] sm:$0xf] %v867
      %887 = vst [vmem:[%s365 + $0x58] sm:$0xf] %v868
      %888 = vst [vmem:[%s365 + $0x60] sm:$0xf] %v869
      %889 = vst [vmem:[%s365 + $0x68] sm:$0xf] %v870
      %890 = vst [vmem:[%s365 + $0x70] sm:$0xf] %v871
      %891 = vst [vmem:[%s365 + $0x78] sm:$0xf] %v872
      %892 = vst [vmem:[%s365 + $0x80] sm:$0xf] %v873
      %vm893 = vcmask 527360
      %894 = vst.msk [vmem:[%s365 + $0x88] sm:$0xf] %vm893, %v874
      %v895 = vlaneseq
      %v896 = vand.u32 %v895, 127
      %v897 = vadd.s32 %v896, 128
      %v898 = vand.u32 %v896, 15
      %v899 = vand.u32 %v897, 15
      %900 = vrot.lane.b32.xlu0 %v483, 17
      %v901 = vpop.permute.xlu0 %900
      %902 = vrot.lane.b32.xlu0 %v484, 17
      %v903 = vpop.permute.xlu0 %902
      %vm904 = vcmp.lt.s32.totalorder %v896, 17
      %v905 = vsel %vm904, %v901, %v903
      %v906 = vsel %vm904, %v903, %v901
      %vm907 = vcmp.ge.s32.totalorder %v896, 16
      %vm908 = vcmp.ge.s32.totalorder %v897, 16
      %vm909 = vcmp.ge.s32.totalorder %v898, 1
      %vm910 = vcmp.ge.s32.totalorder %v899, 1
      %vm911 = vmand %vm907, %vm909
      %vm912 = vmand %vm908, %vm910
      %v913 = vsel %vm911, %v906, 0.0
      %v914 = vsel %vm912, %v905, 0.0
      %915 = vst [vmem:[#allocation2] sm:$0xff] %v913
      %916 = vst [vmem:[#allocation2 + $0x8] sm:$0xff] %v914
      %917 = vrot.lane.b32.xlu0 %v483, 16
      %v918 = vpop.permute.xlu0 %917
      %919 = vrot.lane.b32.xlu0 %v484, 16
      %v920 = vpop.permute.xlu0 %919
      %vm921 = vcmp.lt.s32.totalorder %v896, 16
      %v922 = vsel %vm921, %v918, %v920
      %v923 = vsel %vm921, %v920, %v918
      %v924 = vsel %vm907, %v923, 0.0
      %v925 = vsel %vm908, %v922, 0.0
      %926 = vst [vmem:[#allocation2 + $0x10] sm:$0xff] %v924
      %927 = vst [vmem:[#allocation2 + $0x18] sm:$0xff] %v925
      %928 = vrot.lane.b32.xlu0 %v483, 15
      %v929 = vpop.permute.xlu0 %928
      %930 = vrot.lane.b32.xlu0 %v484, 15
      %v931 = vpop.permute.xlu0 %930
      %vm932 = vcmp.lt.s32.totalorder %v896, 15
      %v933 = vsel %vm932, %v929, %v931
      %v934 = vsel %vm932, %v931, %v929
      %vm935 = vcmp.le.s32.totalorder %v898, 14
      %vm936 = vcmp.le.s32.totalorder %v899, 14
      %vm937 = vmand %vm907, %vm935
      %vm938 = vmand %vm908, %vm936
      %v939 = vsel %vm937, %v934, 0.0
      %v940 = vsel %vm938, %v933, 0.0
      %941 = vst [vmem:[#allocation2 + $0x20] sm:$0xff] %v939
      %942 = vst [vmem:[#allocation2 + $0x28] sm:$0xff] %v940
      %943 = vrot.lane.b32.xlu0 %v483, 1
      %v944 = vpop.permute.xlu0 %943
      %945 = vrot.lane.b32.xlu0 %v484, 1
      %v946 = vpop.permute.xlu0 %945
      %vm947 = vcmp.lt.s32.totalorder %v896, 1
      %v948 = vsel %vm947, %v944, %v946
      %v949 = vsel %vm947, %v946, %v944
      %v950 = vsel %vm909, %v949, 0.0
      %v951 = vsel %vm910, %v948, 0.0
      %952 = vst [vmem:[#allocation2 + $0x30] sm:$0xff] %v950
      %953 = vst [vmem:[#allocation2 + $0x38] sm:$0xff] %v951
      %954 = vst [vmem:[#allocation2 + $0x40] sm:$0xff] %v483
      %955 = vst [vmem:[#allocation2 + $0x48] sm:$0xff] %v484
      %956 = vrot.lane.b32.xlu0 %v483, 127
      %v957 = vpop.permute.xlu0 %956
      %958 = vrot.lane.b32.xlu0 %v484, 127
      %v959 = vpop.permute.xlu0 %958
      %vm960 = vcmp.lt.s32.totalorder %v896, 127
      %v961 = vsel %vm960, %v957, %v959
      %v962 = vsel %vm960, %v959, %v957
      %v963 = vsel %vm935, %v961, 0.0
      %v964 = vsel %vm936, %v962, 0.0
      %965 = vst [vmem:[#allocation2 + $0x50] sm:$0xff] %v963
      %966 = vst [vmem:[#allocation2 + $0x58] sm:$0xff] %v964
      %967 = vrot.lane.b32.xlu0 %v483, 113
      %v968 = vpop.permute.xlu0 %967
      %969 = vrot.lane.b32.xlu0 %v484, 113
      %v970 = vpop.permute.xlu0 %969
      %vm971 = vcmp.lt.s32.totalorder %v896, 113
      %v972 = vsel %vm971, %v968, %v970
      %v973 = vsel %vm971, %v970, %v968
      %vm974 = vcmp.lt.s32.totalorder %v896, 240
      %vm975 = vcmp.lt.s32.totalorder %v897, 240
      %vm976 = vmand %vm974, %vm909
      %vm977 = vmand %vm975, %vm910
      %v978 = vsel %vm976, %v972, 0.0
      %v979 = vsel %vm977, %v973, 0.0
      %980 = vst [vmem:[#allocation2 + $0x60] sm:$0xff] %v978
      %981 = vst [vmem:[#allocation2 + $0x68] sm:$0xff] %v979
      %982 = vrot.lane.b32.xlu0 %v483, 112
      %v983 = vpop.permute.xlu0 %982
      %984 = vrot.lane.b32.xlu0 %v484, 112
      %v985 = vpop.permute.xlu0 %984
      %vm986 = vcmp.lt.s32.totalorder %v896, 112
      %v987 = vsel %vm986, %v983, %v985
      %v988 = vsel %vm986, %v985, %v983
      %v989 = vsel %vm974, %v987, 0.0
      %v990 = vsel %vm975, %v988, 0.0
      %991 = vst [vmem:[#allocation2 + $0x70] sm:$0xff] %v989
      %992 = vst [vmem:[#allocation2 + $0x78] sm:$0xff] %v990
      %993 = vrot.lane.b32.xlu0 %v483, 111
      %v994 = vpop.permute.xlu0 %993
      %995 = vrot.lane.b32.xlu0 %v484, 111
      %v996 = vpop.permute.xlu0 %995
      %vm997 = vcmp.lt.s32.totalorder %v896, 111
      %v998 = vsel %vm997, %v994, %v996
      %v999 = vsel %vm997, %v996, %v994
      %vm1000 = vmand %vm974, %vm935
      %vm1001 = vmand %vm975, %vm936
      %v1002 = vsel %vm1000, %v998, 0.0
      %v1003 = vsel %vm1001, %v999, 0.0
      %1004 = vst [vmem:[#allocation2 + $0x80] sm:$0xff] %v1002
      %1005 = vst [vmem:[#allocation2 + $0x88] sm:$0xff] %v1003
      %v1006 = vld [vmem:[%s6] sm:$0xff]
      %v1007 = vld [vmem:[%s6 + $0x8] sm:$0xff]
      %v1008 = vld [vmem:[%s6 + $0x10] sm:$0xff]
      %v1009 = vld [vmem:[%s6 + $0x18] sm:$0xff]
      %v1010 = vld [vmem:[%s6 + $0x20] sm:$0xff]
      %v1011 = vld [vmem:[%s6 + $0x28] sm:$0xff]
      %v1012 = vld [vmem:[%s6 + $0x30] sm:$0xff]
      %v1013 = vld [vmem:[%s6 + $0x38] sm:$0xff]
      %v1014 = vld [vmem:[%s6 + $0x40] sm:$0xff]
      %v1015 = vld [vmem:[%s6 + $0x48] sm:$0xff]
      %v1016 = vld [vmem:[%s6 + $0x50] sm:$0x1f]
      %v1017 = vld [vmem:[#allocation2] sm:$0xff]
      %v1018 = vld [vmem:[#allocation2 + $0x8] sm:$0xff]
      %v1019 = vld [vmem:[#allocation2 + $0x10] sm:$0xff]
      %v1020 = vld [vmem:[#allocation2 + $0x18] sm:$0xff]
      %v1021 = vld [vmem:[#allocation2 + $0x20] sm:$0xff]
      %v1022 = vld [vmem:[#allocation2 + $0x28] sm:$0xff]
      %v1023 = vld [vmem:[#allocation2 + $0x30] sm:$0xff]
      %v1024 = vld [vmem:[#allocation2 + $0x38] sm:$0xff]
      %v1025 = vld [vmem:[#allocation2 + $0x40] sm:$0xff]
      %v1026 = vld [vmem:[#allocation2 + $0x48] sm:$0xff]
      %v1027 = vld [vmem:[#allocation2 + $0x50] sm:$0xff]
      %v1028 = vld [vmem:[#allocation2 + $0x58] sm:$0xff]
      %v1029 = vld [vmem:[#allocation2 + $0x60] sm:$0xff]
      %v1030 = vld [vmem:[#allocation2 + $0x68] sm:$0xff]
      %v1031 = vld [vmem:[#allocation2 + $0x70] sm:$0xff]
      %v1032 = vld [vmem:[#allocation2 + $0x78] sm:$0xff]
      %v1033 = vld [vmem:[#allocation2 + $0x80] sm:$0xff]
      %v1034 = vld [vmem:[#allocation2 + $0x88] sm:$0xff]
      %v1035 = vld [vmem:[%s7] sm:$0xff]
      %v1036 = vld [vmem:[%s7 + $0x8] sm:$0xff]
      %v1037 = vld [vmem:[%s7 + $0x10] sm:$0xff]
      %v1038 = vld [vmem:[%s7 + $0x18] sm:$0xff]
      %v1039 = vld [vmem:[%s7 + $0x20] sm:$0xff]
      %v1040 = vld [vmem:[%s7 + $0x28] sm:$0xff]
      %v1041 = vld [vmem:[%s7 + $0x30] sm:$0xff]
      %v1042 = vld [vmem:[%s7 + $0x38] sm:$0xff]
      %v1043 = vld [vmem:[%s7 + $0x40] sm:$0xff]
      %v1044 = vld [vmem:[%s7 + $0x48] sm:$0xff]
      %v1045 = vld [vmem:[%s7 + $0x50] sm:$0x1f]
      %1047 = vset.pattern.permute.xlu0 0
      %1048 = vperm.xlu0 %1047, %v1035
      %v1049 = vpop.permute.xlu0 %1048
      %1052 = vset.pattern.permute.xlu0 0
      %1053 = vperm.xlu0 %1052, %v1036
      %v1054 = vpop.permute.xlu0 %1053
      %1057 = vset.pattern.permute.xlu0 0
      %1058 = vperm.xlu0 %1057, %v1037
      %v1059 = vpop.permute.xlu0 %1058
      %1062 = vset.pattern.permute.xlu0 0
      %1063 = vperm.xlu0 %1062, %v1038
      %v1064 = vpop.permute.xlu0 %1063
      %1067 = vset.pattern.permute.xlu0 0
      %1068 = vperm.xlu0 %1067, %v1039
      %v1069 = vpop.permute.xlu0 %1068
      %1072 = vset.pattern.permute.xlu0 0
      %1073 = vperm.xlu0 %1072, %v1040
      %v1074 = vpop.permute.xlu0 %1073
      %1077 = vset.pattern.permute.xlu0 0
      %1078 = vperm.xlu0 %1077, %v1041
      %v1079 = vpop.permute.xlu0 %1078
      %1082 = vset.pattern.permute.xlu0 0
      %1083 = vperm.xlu0 %1082, %v1042
      %v1084 = vpop.permute.xlu0 %1083
      %1087 = vset.pattern.permute.xlu0 0
      %1088 = vperm.xlu0 %1087, %v1043
      %v1089 = vpop.permute.xlu0 %1088
      %1092 = vset.pattern.permute.xlu0 0
      %1093 = vperm.xlu0 %1092, %v1044
      %v1094 = vpop.permute.xlu0 %1093
      %1097 = vset.pattern.permute.xlu0 0
      %1098 = vperm.xlu0 %1097, %v1045
      %v1099 = vpop.permute.xlu0 %1098
      %vm1101 = vcmask 588800
      %v1103 = vsel %vm1101, %v1006, 0
      %v1106 = vsel %vm1101, %v1007, 0
      %v1109 = vsel %vm1101, %v1008, 0
      %v1112 = vsel %vm1101, %v1009, 0
      %v1115 = vsel %vm1101, %v1010, 0
      %v1118 = vsel %vm1101, %v1011, 0
      %v1121 = vsel %vm1101, %v1012, 0
      %v1124 = vsel %vm1101, %v1013, 0
      %v1127 = vsel %vm1101, %v1014, 0
      %v1130 = vsel %vm1101, %v1015, 0
      %v1133 = vsel %vm1101, %v1016, 0
      %1135 = vmatprep.subr.mxu0 %v1018
      %1136 = vmatpush1.msra.mxu0 %v1017
      %1137 = vmatprep.subr.mxu0 %v1020
      %1138 = vmatpush1.msra.mxu0 %v1019
      %1139 = vmatprep.subr.mxu0 %v1022
      %1140 = vmatpush1.msra.mxu0 %v1021
      %1141 = vmatprep.subr.mxu0 %v1024
      %1142 = vmatpush1.msra.mxu0 %v1023
      %1143 = vmatprep.subr.mxu0 %v1026
      %1144 = vmatpush1.msra.mxu0 %v1025
      %1145 = vmatprep.subr.mxu0 %v1028
      %1146 = vmatpush1.msra.mxu0 %v1027
      %1147 = vmatprep.subr.mxu0 %v1030
      %1148 = vmatpush1.msra.mxu0 %v1029
      %1149 = vmatprep.subr.mxu0 %v1032
      %1150 = vmatpush1.msra.mxu0 %v1031
      %1151 = vmatprep.subr.mxu0 %v1034
      %1152 = vmatpush1.msra.mxu0 %v1033
      %1153 = vmatprep.subr.mxu0 0.0
      %1154 = vmatpush1.msra.mxu0 0.0
      %1155 = vmatprep.subr.mxu0 0.0
      %1156 = vmatpush1.msra.mxu0 0.0
      %1157 = vmatprep.subr.mxu0 0.0
      %1158 = vmatpush1.msra.mxu0 0.0
      %1159 = vmatprep.subr.mxu0 0.0
      %1160 = vmatpush1.msra.mxu0 0.0
      %1161 = vmatprep.subr.mxu0 0.0
      %1162 = vmatpush1.msra.mxu0 0.0
      %1163 = vmatprep.subr.mxu0 0.0
      %1164 = vmatpush1.msra.mxu0 0.0
      %1165 = vmatprep.subr.mxu0 0.0
      %1166 = vmatpush1.msra.mxu0 0.0
      %1167 = vmatprep.subr.mxu0 0.0
      %1168 = vmatpush1.msra.mxu0 0.0
      %1169 = vmatprep.subr.mxu0 0.0
      %1170 = vmatpush1.msra.mxu0 0.0
      %1171 = vmatprep.subr.mxu0 0.0
      %1172 = vmatpush1.msra.mxu0 0.0
      %1173 = vmatprep.subr.mxu0 0.0
      %1174 = vmatpush1.msra.mxu0 0.0
      %1175 = vmatprep.subr.mxu0 0.0
      %1176 = vmatpush1.msra.mxu0 0.0
      %1177 = vmatprep.subr.mxu0 0.0
      %1178 = vmatpush1.msra.mxu0 0.0
      %1179 = vmatprep.subr.mxu0 0.0
      %1180 = vmatpush1.msra.mxu0 0.0
      %1181 = vmatprep.subr.mxu0 0.0
      %1182 = vmatpush1.msra.mxu0 0.0
      %1183 = vmatprep.subr.mxu0 0.0
      %1184 = vmatpush1.msra.mxu0 0.0
      %1185 = vmatprep.subr.mxu0 0.0
      %1186 = vmatpush1.msra.mxu0 0.0
      %1187 = vmatprep.subr.mxu0 0.0
      %1188 = vmatpush1.msra.mxu0 0.0
      %1189 = vmatprep.subr.mxu0 0.0
      %1190 = vmatpush1.msra.mxu0 0.0
      %1191 = vmatprep.subr.mxu0 0.0
      %1192 = vmatpush1.msra.mxu0 0.0
      %1193 = vmatprep.subr.mxu0 0.0
      %1194 = vmatpush1.msra.mxu0 0.0
      %1195 = vmatprep.subr.mxu0 0.0
      %1196 = vmatpush1.msra.mxu0 0.0
      %1197 = vmatprep.subr.mxu0 0.0
      %1198 = vmatpush1.msra.mxu0 0.0
      %1199 = vmatprep.mubr.f32.mxu0 0.0
      %1200 = vmatmul.mubr.f32.gmra.mrb[0].mxu0 %v1103
      %v1201 = vpop.f32.mrb[0].mxu0
      %v1202 = vadd.f32 %v1049, %v1201
      %v1203 = vpop.f32.mrb[0].mxu0
      %v1204 = vadd.f32 %v1049, %v1203
      %1205 = vmatprep.mubr.f32.mxu0 0.0
      %1206 = vmatmul.mubr.f32.gmra.mrb[0].mxu0 %v1106
      %v1207 = vpop.f32.mrb[0].mxu0
      %v1208 = vadd.f32 %v1054, %v1207
      %v1209 = vpop.f32.mrb[0].mxu0
      %v1210 = vadd.f32 %v1054, %v1209
      %1211 = vmatprep.mubr.f32.mxu0 0.0
      %1212 = vmatmul.mubr.f32.gmra.mrb[0].mxu0 %v1109
      %v1213 = vpop.f32.mrb[0].mxu0
      %v1214 = vadd.f32 %v1059, %v1213
      %v1215 = vpop.f32.mrb[0].mxu0
      %v1216 = vadd.f32 %v1059, %v1215
      %1217 = vmatprep.mubr.f32.mxu0 0.0
      %1218 = vmatmul.mubr.f32.gmra.mrb[0].mxu0 %v1112
      %v1219 = vpop.f32.mrb[0].mxu0
      %v1220 = vadd.f32 %v1064, %v1219
      %v1221 = vpop.f32.mrb[0].mxu0
      %v1222 = vadd.f32 %v1064, %v1221
      %1223 = vmatprep.mubr.f32.mxu0 0.0
      %1224 = vmatmul.mubr.f32.gmra.mrb[0].mxu0 %v1115
      %v1225 = vpop.f32.mrb[0].mxu0
      %v1226 = vadd.f32 %v1069, %v1225
      %v1227 = vpop.f32.mrb[0].mxu0
      %v1228 = vadd.f32 %v1069, %v1227
      %1229 = vmatprep.mubr.f32.mxu0 0.0
      %1230 = vmatmul.mubr.f32.gmra.mrb[0].mxu0 %v1118
      %v1231 = vpop.f32.mrb[0].mxu0
      %v1232 = vadd.f32 %v1074, %v1231
      %v1233 = vpop.f32.mrb[0].mxu0
      %v1234 = vadd.f32 %v1074, %v1233
      %1235 = vmatprep.mubr.f32.mxu0 0.0
      %1236 = vmatmul.mubr.f32.gmra.mrb[0].mxu0 %v1121
      %v1237 = vpop.f32.mrb[0].mxu0
      %v1238 = vadd.f32 %v1079, %v1237
      %v1239 = vpop.f32.mrb[0].mxu0
      %v1240 = vadd.f32 %v1079, %v1239
      %1241 = vmatprep.mubr.f32.mxu0 0.0
      %1242 = vmatmul.mubr.f32.gmra.mrb[0].mxu0 %v1124
      %v1243 = vpop.f32.mrb[0].mxu0
      %v1244 = vadd.f32 %v1084, %v1243
      %v1245 = vpop.f32.mrb[0].mxu0
      %v1246 = vadd.f32 %v1084, %v1245
      %1247 = vmatprep.mubr.f32.mxu0 0.0
      %1248 = vmatmul.mubr.f32.gmra.mrb[0].mxu0 %v1127
      %v1249 = vpop.f32.mrb[0].mxu0
      %v1250 = vadd.f32 %v1089, %v1249
      %v1251 = vpop.f32.mrb[0].mxu0
      %v1252 = vadd.f32 %v1089, %v1251
      %1253 = vmatprep.mubr.f32.mxu0 0.0
      %1254 = vmatmul.mubr.f32.gmra.mrb[0].mxu0 %v1130
      %v1255 = vpop.f32.mrb[0].mxu0
      %v1256 = vadd.f32 %v1094, %v1255
      %v1257 = vpop.f32.mrb[0].mxu0
      %v1258 = vadd.f32 %v1094, %v1257
      %1259 = vmatprep.mubr.f32.mxu0 0.0
      %1260 = vmatmul.mubr.f32.gmra.mrb[0].mxu0 %v1133
      %v1261 = vpop.f32.mrb[0].mxu0
      %v1262 = vadd.f32 %v1099, %v1261
      %v1263 = vpop.f32.mrb[0].mxu0
      %v1264 = vadd.f32 %v1099, %v1263
      %1265 = vdwg.mxu0
      %v1266 = vmul.f32 %v1202, 0.5
      %v1267 = vmul.f32 %v1204, 0.5
      %v1268 = vmul.f32 %v1208, 0.5
      %v1269 = vmul.f32 %v1210, 0.5
      %v1270 = vmul.f32 %v1214, 0.5
      %v1271 = vmul.f32 %v1216, 0.5
      %v1272 = vmul.f32 %v1220, 0.5
      %v1273 = vmul.f32 %v1222, 0.5
      %v1274 = vmul.f32 %v1226, 0.5
      %v1275 = vmul.f32 %v1228, 0.5
      %v1276 = vmul.f32 %v1232, 0.5
      %v1277 = vmul.f32 %v1234, 0.5
      %v1278 = vmul.f32 %v1238, 0.5
      %v1279 = vmul.f32 %v1240, 0.5
      %v1280 = vmul.f32 %v1244, 0.5
      %v1281 = vmul.f32 %v1246, 0.5
      %v1282 = vmul.f32 %v1250, 0.5
      %v1283 = vmul.f32 %v1252, 0.5
      %v1284 = vmul.f32 %v1256, 0.5
      %v1285 = vmul.f32 %v1258, 0.5
      %v1286 = vmul.f32 %v1262, 0.5
      %v1287 = vmul.f32 %v1264, 0.5
      %v1288 = vmul.f32 %v1202, 0.70710677
      %v1289 = vmul.f32 %v1204, 0.70710677
      %v1290 = vmul.f32 %v1208, 0.70710677
      %v1291 = vmul.f32 %v1210, 0.70710677
      %v1292 = vmul.f32 %v1214, 0.70710677
      %v1293 = vmul.f32 %v1216, 0.70710677
      %v1294 = vmul.f32 %v1220, 0.70710677
      %v1295 = vmul.f32 %v1222, 0.70710677
      %v1296 = vmul.f32 %v1226, 0.70710677
      %v1297 = vmul.f32 %v1228, 0.70710677
      %v1298 = vmul.f32 %v1232, 0.70710677
      %v1299 = vmul.f32 %v1234, 0.70710677
      %v1300 = vmul.f32 %v1238, 0.70710677
      %v1301 = vmul.f32 %v1240, 0.70710677
      %v1302 = vmul.f32 %v1244, 0.70710677
      %v1303 = vmul.f32 %v1246, 0.70710677
      %v1304 = vmul.f32 %v1250, 0.70710677
      %v1305 = vmul.f32 %v1252, 0.70710677
      %v1306 = vmul.f32 %v1256, 0.70710677
      %v1307 = vmul.f32 %v1258, 0.70710677
      %v1308 = vmul.f32 %v1262, 0.70710677
      %v1309 = vmul.f32 %v1264, 0.70710677
      %v1310 = verf.f32.pop %v1288
      %v1311 = verf.f32.pop %v1289
      %v1312 = verf.f32.pop %v1290
      %v1313 = verf.f32.pop %v1291
      %v1314 = verf.f32.pop %v1292
      %v1315 = verf.f32.pop %v1293
      %v1316 = verf.f32.pop %v1294
      %v1317 = verf.f32.pop %v1295
      %v1318 = verf.f32.pop %v1296
      %v1319 = verf.f32.pop %v1297
      %v1320 = verf.f32.pop %v1298
      %v1321 = verf.f32.pop %v1299
      %v1322 = verf.f32.pop %v1300
      %v1323 = verf.f32.pop %v1301
      %v1324 = verf.f32.pop %v1302
      %v1325 = verf.f32.pop %v1303
      %v1326 = verf.f32.pop %v1304
      %v1327 = verf.f32.pop %v1305
      %v1328 = verf.f32.pop %v1306
      %v1329 = verf.f32.pop %v1307
      %v1330 = verf.f32.pop %v1308
      %v1331 = verf.f32.pop %v1309
      %v1332 = vadd.f32 %v1310, 1.0
      %v1333 = vadd.f32 %v1311, 1.0
      %v1334 = vadd.f32 %v1312, 1.0
      %v1335 = vadd.f32 %v1313, 1.0
      %v1336 = vadd.f32 %v1314, 1.0
      %v1337 = vadd.f32 %v1315, 1.0
      %v1338 = vadd.f32 %v1316, 1.0
      %v1339 = vadd.f32 %v1317, 1.0
      %v1340 = vadd.f32 %v1318, 1.0
      %v1341 = vadd.f32 %v1319, 1.0
      %v1342 = vadd.f32 %v1320, 1.0
      %v1343 = vadd.f32 %v1321, 1.0
      %v1344 = vadd.f32 %v1322, 1.0
      %v1345 = vadd.f32 %v1323, 1.0
      %v1346 = vadd.f32 %v1324, 1.0
      %v1347 = vadd.f32 %v1325, 1.0
      %v1348 = vadd.f32 %v1326, 1.0
      %v1349 = vadd.f32 %v1327, 1.0
      %v1350 = vadd.f32 %v1328, 1.0
      %v1351 = vadd.f32 %v1329, 1.0
      %v1352 = vadd.f32 %v1330, 1.0
      %v1353 = vadd.f32 %v1331, 1.0
      %v1354 = vmul.f32 %v1266, %v1332
      %v1355 = vmul.f32 %v1267, %v1333
      %v1356 = vmul.f32 %v1268, %v1334
      %v1357 = vmul.f32 %v1269, %v1335
      %v1358 = vmul.f32 %v1270, %v1336
      %v1359 = vmul.f32 %v1271, %v1337
      %v1360 = vmul.f32 %v1272, %v1338
      %v1361 = vmul.f32 %v1273, %v1339
      %v1362 = vmul.f32 %v1274, %v1340
      %v1363 = vmul.f32 %v1275, %v1341
      %v1364 = vmul.f32 %v1276, %v1342
      %v1365 = vmul.f32 %v1277, %v1343
      %v1366 = vmul.f32 %v1278, %v1344
      %v1367 = vmul.f32 %v1279, %v1345
      %v1368 = vmul.f32 %v1280, %v1346
      %v1369 = vmul.f32 %v1281, %v1347
      %v1370 = vmul.f32 %v1282, %v1348
      %v1371 = vmul.f32 %v1283, %v1349
      %v1372 = vmul.f32 %v1284, %v1350
      %v1373 = vmul.f32 %v1285, %v1351
      %v1374 = vmul.f32 %v1286, %v1352
      %v1375 = vmul.f32 %v1287, %v1353
      %1376 = vst [vmem:[%s360] sm:$0xff] %v1354
      %1377 = vst [vmem:[%s360 + $0x8] sm:$0xff] %v1355
      %1378 = vst [vmem:[%s360 + $0x10] sm:$0xff] %v1356
      %1379 = vst [vmem:[%s360 + $0x18] sm:$0xff] %v1357
      %1380 = vst [vmem:[%s360 + $0x20] sm:$0xff] %v1358
      %1381 = vst [vmem:[%s360 + $0x28] sm:$0xff] %v1359
      %1382 = vst [vmem:[%s360 + $0x30] sm:$0xff] %v1360
      %1383 = vst [vmem:[%s360 + $0x38] sm:$0xff] %v1361
      %1384 = vst [vmem:[%s360 + $0x40] sm:$0xff] %v1362
      %1385 = vst [vmem:[%s360 + $0x48] sm:$0xff] %v1363
      %1386 = vst [vmem:[%s360 + $0x50] sm:$0xff] %v1364
      %1387 = vst [vmem:[%s360 + $0x58] sm:$0xff] %v1365
      %1388 = vst [vmem:[%s360 + $0x60] sm:$0xff] %v1366
      %1389 = vst [vmem:[%s360 + $0x68] sm:$0xff] %v1367
      %1390 = vst [vmem:[%s360 + $0x70] sm:$0xff] %v1368
      %1391 = vst [vmem:[%s360 + $0x78] sm:$0xff] %v1369
      %1392 = vst [vmem:[%s360 + $0x80] sm:$0xff] %v1370
      %1393 = vst [vmem:[%s360 + $0x88] sm:$0xff] %v1371
      %1394 = vst [vmem:[%s360 + $0x90] sm:$0xff] %v1372
      %1395 = vst [vmem:[%s360 + $0x98] sm:$0xff] %v1373
      %1396 = vst [vmem:[%s360 + $0xa0] sm:$0x1f] %v1374
      %1397 = vst [vmem:[%s360 + $0xa8] sm:$0x1f] %v1375
      %p1398 = scmp.lt.s32.totalorder %s21, 1
      %s1399 = scalar_select %p1398, %s21, 1
      %s1400 = smul.addr %s1399, 22
      %s1401 = smul.addr %s1400, 8
      %s1402 = scalar_lea.vmem %s8, %s1401
      %p1403 = scmp.lt.s32.totalorder %s21, 1
      %s1404 = scalar_select %p1403, %s21, 1
      %s1405 = smul.addr %s1404, 18
      %s1406 = smul.addr %s1405, 8
      %s1407 = scalar_lea.vmem %s9, %s1406
      // Predicated region
      $region53: #{fused_forward.1} parent=51 // pred_check
        %p1408 = pneg %p217
      $region54: #{fused_forward.1} parent=51 // pred_check_branch
        %1410 = sbr.rel (%p1408) target = $region56
      $region55: #{fused_forward.1} parent=51 // pred_region
        _
      $region56: #{fused_forward.1} parent=51 // pred_fallthru
        _
      // Predicated region
      $region57: #{fused_forward.1} parent=51 // pred_check
        %p1411 = pneg %p243
      $region58: #{fused_forward.1} parent=51 // pred_check_branch
        %1413 = sbr.rel (%p1411) target = $region60
      $region59: #{fused_forward.1} parent=51 // pred_region
        _
      $region60: #{fused_forward.1} parent=51 // pred_fallthru
        _
    $region52: #{fused_forward.1} parent=5 // pred_fallthru
      _
    %p1414 = scmp.le.s32.totalorder 2, %s16
    // Predicated region
    $region61: #{fused_forward.1} parent=5 // pred_check
      %p1415 = pneg %p1414
    $region62: #{fused_forward.1} parent=5 // pred_check_branch
      %1417 = sbr.rel (%p1415) target = $region64
    $region63: #{fused_forward.1} parent=5 // pred_region
      %s1418 = ssub.s32 %s16, 2
      // Predicated region
      $region65: #{fused_forward.1} parent=63 // pred_check
        %p1419 = pneg %p223
      $region66: #{fused_forward.1} parent=63 // pred_check_branch
        %1421 = sbr.rel (%p1419) target = $region68
      $region67: #{fused_forward.1} parent=63 // pred_region
        %p1422 = scmp.lt.s32.totalorder %s22, 1
        %s1423 = scalar_select %p1422, %s22, 1
        %s1424 = smul.addr %s1423, 22
        %s1425 = smul.addr %s1424, 8
        %s1426 = scalar_lea.vmem %s8, %s1425
      $region68: #{fused_forward.1} parent=63 // pred_fallthru
        _
      // Predicated region
      $region69: #{fused_forward.1} parent=63 // pred_check
        %p1427 = pneg %p249
      $region70: #{fused_forward.1} parent=63 // pred_check_branch
        %1429 = sbr.rel (%p1427) target = $region72
      $region71: #{fused_forward.1} parent=63 // pred_region
        %p1430 = scmp.lt.s32.totalorder %s22, 1
        %s1431 = scalar_select %p1430, %s22, 1
        %s1432 = smul.addr %s1431, 18
        %s1433 = smul.addr %s1432, 8
        %s1434 = scalar_lea.vmem %s9, %s1433
      $region72: #{fused_forward.1} parent=63 // pred_fallthru
        _
    $region64: #{fused_forward.1} parent=5 // pred_fallthru
      _
  $region6: #{fused_forward.1} parent=0 // loop_footer
    %s20 = sadd.s32 1, %s16
  $region7: #{fused_forward.1} parent=0 // loop_footer_branch
    %15 = sbr.rel target = $region3
  $region8: #{fused_forward.1} parent=0 // loop_exit
    _

</llo_original>
